<compile_context>
chip_gen: v5e
topology: v5e:2x2
jax: 0.10.0
libtpu: 0.0.40
codegen_flags: <defaults>
</compile_context>

<pallas_src>
import math
from functools import partial

import numpy as np
import jax
import jax.numpy as jnp
from jax.experimental import pallas as pl
from jax.experimental.pallas import tpu as pltpu


# ---------------------------------------------------------------------------
# sincos positional embedding (numpy, identical to the PyTorch helpers)
# ---------------------------------------------------------------------------
def get_1d_sincos_pos_embed_from_grid(embed_dim, pos):
    assert embed_dim % 2 == 0
    omega = np.arange(embed_dim // 2, dtype=np.float32)
    omega /= embed_dim / 2.0
    omega = 1.0 / 10000 ** omega
    pos = pos.reshape(-1)
    out = np.einsum('m,d->md', pos, omega)
    return np.concatenate([np.sin(out), np.cos(out)], axis=1)


def get_2d_sincos_pos_embed_from_grid(embed_dim, grid):
    assert embed_dim % 2 == 0
    emb_h = get_1d_sincos_pos_embed_from_grid(embed_dim // 2, grid[0])
    emb_w = get_1d_sincos_pos_embed_from_grid(embed_dim // 2, grid[1])
    return np.concatenate([emb_h, emb_w], axis=1)


def get_2d_sincos_pos_embed(embed_dim, grid_size):
    grid_h = np.arange(grid_size, dtype=np.float32)
    grid_w = np.arange(grid_size, dtype=np.float32)
    grid = np.meshgrid(grid_w, grid_h)
    grid = np.stack(grid, axis=0).reshape([2, 1, grid_size, grid_size])
    return get_2d_sincos_pos_embed_from_grid(embed_dim, grid)


def _layernorm(x, g, b, eps=1e-6):
    mu = jnp.mean(x, axis=-1, keepdims=True)
    var = jnp.mean((x - mu) ** 2, axis=-1, keepdims=True)
    return (x - mu) * jax.lax.rsqrt(var + eps) * g + b


# ---------------------------------------------------------------------------
# Pallas kernel: one batch element per grid step
# ---------------------------------------------------------------------------
def _resampler_kernel(x_ref, q_ref, wkv_ref, kbias_ref, bv_ref, wo_ref, bo_ref,
                      gkv_ref, bkv_ref, gpost_ref, bpost_ref, out_ref,
                      *, num_heads):
    eps = 1e-6                                  # module uses LayerNorm(eps=1e-06)
    H = num_heads
    x = x_ref[...]                              # (S, E) f32 (batch dim squeezed)
    E = x.shape[-1]
    D = E // H
    Q = q_ref.shape[1]

    # ln_kv -- statistics in f32
    mu = jnp.mean(x, axis=-1, keepdims=True)
    var = jnp.mean((x - mu) ** 2, axis=-1, keepdims=True)
    kv = (x - mu) * jax.lax.rsqrt(var + eps) * gkv_ref[...] + bkv_ref[...]
    kv_bf = kv.astype(jnp.bfloat16)             # MXU operand

    # Per-head loop (static unroll).  All matmuls are 2-D MXU ops; each head's
    # intermediates are dead by the end of its iteration; the output projection is
    # folded in per head and accumulated, so there is no concatenate / no (H*Q*D)
    # liveness and the final store is one lane-dense (Q, E) write.
    # (v6e note: at realistic Q>=256 the M dimension of the attention matmuls fills
    #  the 256-wide MXU; at toy sizes it is inherently under-filled.)
    o = jnp.zeros((Q, E), jnp.float32)
    for h in range(H):
        # fused K|V projection for this head: one (S,E) @ (E,2D) matmul
        kvh = jnp.dot(kv_bf, wkv_ref[h], preferred_element_type=jnp.float32)
        kh = (kvh[:, :D] + kbias_ref[h]).astype(jnp.bfloat16)   # pos_kv@Wk+bk folded in
        vh = (kvh[:, D:] + bv_ref[h]).astype(jnp.bfloat16)
        # scores: q already carries 1/sqrt(D); contract on D (no materialized k^T)
        s = jnp.einsum("qd,sd->qs", q_ref[h], kh,
                       preferred_element_type=jnp.float32)      # (Q, S) f32
        s = s - jnp.max(s, axis=-1, keepdims=True)
        e = jnp.exp(s)                                          # EUP, f32
        p = e * pl.reciprocal(jnp.sum(e, axis=-1, keepdims=True), approx=True)
        oh = jnp.dot(p.astype(jnp.bfloat16), vh,
                     preferred_element_type=jnp.float32)        # (Q, D)
        o = o + jnp.dot(oh.astype(jnp.bfloat16), wo_ref[h],
                        preferred_element_type=jnp.float32)     # accumulate (Q, E)
    o = o + bo_ref[...]

    # ln_post -- f32
    mu2 = jnp.mean(o, axis=-1, keepdims=True)
    var2 = jnp.mean((o - mu2) ** 2, axis=-1, keepdims=True)
    out_ref[...] = (o - mu2) * jax.lax.rsqrt(var2 + eps) * gpost_ref[...] + bpost_ref[...]


def resampler_forward(x, kp, *, num_heads):
    """x: (B, S, E) or (S, E).  kp: packed kernel params.  Returns (B, Q, E)."""
    mark = (x.ndim == 2)
    if mark:
        x = x[None]
    B, S, E = x.shape
    H = num_heads
    D = E // H
    Q = kp["q"].shape[1]
    assert S == kp["kbias"].shape[1], "pos-embed resize path not packed for this S"

    rep2 = lambda shape: pl.BlockSpec(shape, lambda b: (0, 0))
    rep3 = lambda shape: pl.BlockSpec(shape, lambda b: (0, 0, 0))
    in_specs = [
        pl.BlockSpec((pl.Squeezed(), S, E), lambda b: (b, 0, 0)),  # x: one batch / step
        rep3((H, Q, D)),        # q      bf16, hoisted projection, scale folded in
        rep3((H, E, 2 * D)),    # wkv    bf16, fused K|V weights, head-major
        rep3((H, S, D)),        # kbias  f32, pos_kv @ Wk + bk  (batch-invariant)
        rep3((H, 1, D)),        # bv     f32
        rep3((H, D, E)),        # wo     bf16, head-major rows
        rep2((1, E)),           # bo
        rep2((1, E)), rep2((1, E)),   # ln_kv   gamma, beta
        rep2((1, E)), rep2((1, E)),   # ln_post gamma, beta
    ]
    args = (x, kp["q"], kp["wkv"], kp["kbias"], kp["bv"], kp["wo"], kp["bo"],
            kp["g_kv"], kp["b_kv"], kp["g_post"], kp["b_post"])

    flops = B * (4 * S * E * E + 4 * Q * S * E + 2 * Q * E * E)
    bytes_accessed = sum(int(a.size) * a.dtype.itemsize for a in args) + B * Q * E * 4

    out = pl.pallas_call(
        partial(_resampler_kernel, num_heads=H),
        out_shape=jax.ShapeDtypeStruct((B, Q, E), jnp.float32),
        grid=(B,),
        in_specs=in_specs,
        out_specs=pl.BlockSpec((pl.Squeezed(), Q, E), lambda b: (b, 0, 0)),
        compiler_params=pltpu.CompilerParams(
            dimension_semantics=("parallel",),      # batch across TCs (v7x megacore)
            vmem_limit_bytes=32 * 1024 * 1024),
        cost_estimate=pl.CostEstimate(
            flops=flops, transcendentals=B * H * Q * S, bytes_accessed=bytes_accessed),
    )(*args)
    return out[0] if mark else out


# ---------------------------------------------------------------------------
# raw module parameters, packing into kernel form, plain-JAX reference
# ---------------------------------------------------------------------------
def make_raw_params(key, grid_size, embed_dim):
    Q, E = grid_size ** 2, embed_dim
    ks = jax.random.split(key, 9)
    # pos_embed parameter is stored fp16 in the module, used upcast to f32
    pos_embed = get_2d_sincos_pos_embed(E, grid_size).astype(np.float16).astype(np.float32)
    query = 0.02 * jax.random.truncated_normal(ks[0], -2.0, 2.0, (Q, E), jnp.float32)
    w = lambda k, shape, s=0.05: s * jax.random.normal(k, shape, jnp.float32)
    return dict(
        pos_embed=jnp.asarray(pos_embed), query=query,
        wq=w(ks[1], (E, E)), bq=w(ks[2], (1, E), 0.01),
        wk=w(ks[3], (E, E)), bk=w(ks[4], (1, E), 0.01),
        wv=w(ks[5], (E, E)), bv=w(ks[6], (1, E), 0.01),
        wo=w(ks[7], (E, E)), bo=w(ks[8], (1, E), 0.01),
        g_q=jnp.ones((1, E)), b_q=jnp.zeros((1, E)),
        g_kv=jnp.ones((1, E)), b_kv=jnp.zeros((1, E)),
        g_post=jnp.ones((1, E)), b_post=jnp.zeros((1, E)),
    )


def pack_kernel_params(raw, *, num_heads, seq_len):
    """One-time, batch-invariant preprocessing (hoisted out of the kernel)."""
    E = raw["wq"].shape[0]
    H = num_heads
    D = E // H
    Q = raw["query"].shape[0]
    # TODO(synk): bicubic resize of pos_embed (get_abs_pos) when seq_len != grid_size**2;
    #             identity here since the example runs with seq_len == num_queries.
    assert seq_len == Q
    pos = raw["pos_embed"]                                      # (Q, E) == (S, E)
    scale = 1.0 / math.sqrt(D)

    # hoisted query projection (does not depend on x), scale folded in, head-major
    qpos = _layernorm(raw["query"], raw["g_q"], raw["b_q"]) + pos
    q = (qpos @ raw["wq"] + raw["bq"]) * scale
    q_heads = q.reshape(Q, H, D).transpose(1, 0, 2).astype(jnp.bfloat16)    # (H, Q, D)

    # fused K|V weights, head-major: one matmul per head in the kernel
    wk_h = raw["wk"].reshape(E, H, D).transpose(1, 0, 2)
    wv_h = raw["wv"].reshape(E, H, D).transpose(1, 0, 2)
    wkv = jnp.concatenate([wk_h, wv_h], axis=-1).astype(jnp.bfloat16)       # (H, E, 2D)

    # (kv + pos) @ Wk + bk  ==  kv @ Wk + (pos @ Wk + bk): fold the pos term (batch-invariant)
    kbias = (pos @ raw["wk"] + raw["bk"]).reshape(seq_len, H, D).transpose(1, 0, 2)  # (H,S,D)
    bv = raw["bv"].reshape(H, D)[:, None, :]                                 # (H, 1, D)
    wo = raw["wo"].reshape(H, D, E).astype(jnp.bfloat16)                     # (H, D, E)

    return dict(q=q_heads, wkv=wkv, kbias=kbias, bv=bv, wo=wo, bo=raw["bo"],
                g_kv=raw["g_kv"], b_kv=raw["b_kv"],
                g_post=raw["g_post"], b_post=raw["b_post"])


def reference_forward(x, raw, *, num_heads):
    """Plain-JAX f32 reference that follows the original PyTorch module math."""
    kv = _layernorm(x, raw["g_kv"], raw["b_kv"])
    pos = raw["pos_embed"]
    q_in = _layernorm(raw["query"], raw["g_q"], raw["b_q"]) + pos
    k_in = kv + pos[None]
    q = q_in @ raw["wq"] + raw["bq"]
    k = jnp.einsum("bse,ef->bsf", k_in, raw["wk"]) + raw["bk"]
    v = jnp.einsum("bse,ef->bsf", kv, raw["wv"]) + raw["bv"]
    B, S, E = x.shape
    Q, H = q.shape[0], num_heads
    D = E // H
    qh = q.reshape(Q, H, D)
    kh = k.reshape(B, S, H, D)
    vh = v.reshape(B, S, H, D)
    s = jnp.einsum("qhd,bshd->bhqs", qh, kh) / math.sqrt(D)
    p = jax.nn.softmax(s, axis=-1)
    o = jnp.einsum("bhqs,bshd->bqhd", p, vh).reshape(B, Q, E)
    o = jnp.einsum("bqe,ef->bqf", o, raw["wo"]) + raw["bo"]
    return _layernorm(o, raw["g_post"], raw["b_post"])


if __name__ == "__main__":
    grid_size = 4          # num_queries = 16
    embed_dim = 32
    num_heads = 4
    batch = 2              # B >= 2 so the "parallel" grid axis can use both TCs on v7x
    seq = grid_size ** 2   # 16 patches -> pos-embed resize is the identity

    key = jax.random.PRNGKey(0)
    kx, kparam = jax.random.split(key)
    raw = make_raw_params(kparam, grid_size, embed_dim)
    kparams = pack_kernel_params(raw, num_heads=num_heads, seq_len=seq)

    x = jax.random.normal(kx, (batch, seq, embed_dim), jnp.float32)

    out = resampler_forward(x, kparams, num_heads=num_heads)
    out = jax.block_until_ready(out)

    ref = reference_forward(x, raw, num_heads=num_heads)
    assert out.shape == (batch, grid_size ** 2, embed_dim)
    err = float(jnp.max(jnp.abs(out - ref)))
    # kernel uses bf16 MXU operands + approx reciprocal; reference is pure f32
    assert err < 5e-2, err
    print("KERNEL_OK")
</pallas_src>

<mosaic_0001>
module attributes {stable_mosaic.version = 11 : i64} {
  func.func @_resampler_kernel(%arg0: i32, %arg1: memref<1x16x32xf32, #tpu.memory_space<vmem>>, %arg2: memref<4x16x8xbf16, #tpu.memory_space<vmem>>, %arg3: memref<4x32x16xbf16, #tpu.memory_space<vmem>>, %arg4: memref<4x16x8xf32, #tpu.memory_space<vmem>>, %arg5: memref<4x1x8xf32, #tpu.memory_space<vmem>>, %arg6: memref<4x8x32xbf16, #tpu.memory_space<vmem>>, %arg7: memref<1x32xf32, #tpu.memory_space<vmem>>, %arg8: memref<1x32xf32, #tpu.memory_space<vmem>>, %arg9: memref<1x32xf32, #tpu.memory_space<vmem>>, %arg10: memref<1x32xf32, #tpu.memory_space<vmem>>, %arg11: memref<1x32xf32, #tpu.memory_space<vmem>>, %arg12: memref<1x16x32xf32, #tpu.memory_space<vmem>>) attributes {dimension_semantics = [#tpu.dimension_semantics<parallel>], iteration_bounds = array<i64: 2>, scalar_prefetch = 0 : i64, scratch_operands = 0 : i64, tpu.core_type = #tpu.core_type<tc>, window_params = [{transform_indices = @transform_0, window_bounds = array<i64: 1, 16, 32>}, {pipeline_mode = #tpu.pipeline_mode<synchronous>, transform_indices = @transform_1, window_bounds = array<i64: 4, 16, 8>}, {pipeline_mode = #tpu.pipeline_mode<synchronous>, transform_indices = @transform_2, window_bounds = array<i64: 4, 32, 16>}, {pipeline_mode = #tpu.pipeline_mode<synchronous>, transform_indices = @transform_3, window_bounds = array<i64: 4, 16, 8>}, {pipeline_mode = #tpu.pipeline_mode<synchronous>, transform_indices = @transform_4, window_bounds = array<i64: 4, 1, 8>}, {pipeline_mode = #tpu.pipeline_mode<synchronous>, transform_indices = @transform_5, window_bounds = array<i64: 4, 8, 32>}, {pipeline_mode = #tpu.pipeline_mode<synchronous>, transform_indices = @transform_6, window_bounds = array<i64: 1, 32>}, {pipeline_mode = #tpu.pipeline_mode<synchronous>, transform_indices = @transform_7, window_bounds = array<i64: 1, 32>}, {pipeline_mode = #tpu.pipeline_mode<synchronous>, transform_indices = @transform_8, window_bounds = array<i64: 1, 32>}, {pipeline_mode = #tpu.pipeline_mode<synchronous>, transform_indices = @transform_9, window_bounds = array<i64: 1, 32>}, {pipeline_mode = #tpu.pipeline_mode<synchronous>, transform_indices = @transform_10, window_bounds = array<i64: 1, 32>}, {transform_indices = @transform_11, window_bounds = array<i64: 1, 16, 32>}]} {
    %c0 = arith.constant 0 : index
    %c0_0 = arith.constant 0 : index
    %c0_1 = arith.constant 0 : index
    %0 = vector.load %arg1[%c0, %c0_0, %c0_1] : memref<1x16x32xf32, #tpu.memory_space<vmem>>, vector<1x16x32xf32>
    %1 = vector.shape_cast %0 : vector<1x16x32xf32> to vector<16x32xf32>
    %cst = arith.constant dense<0.000000e+00> : vector<16xf32>
    %2 = vector.multi_reduction <add>, %1, %cst [1] : vector<16x32xf32> to vector<16xf32>
    %3 = vector.shape_cast %2 : vector<16xf32> to vector<16x1xf32>
    %cst_2 = arith.constant 3.200000e+01 : f32
    %4 = vector.broadcast %cst_2 : f32 to vector<16x1xf32>
    %5 = arith.divf %3, %4 : vector<16x1xf32>
    %6 = vector.broadcast %5 : vector<16x1xf32> to vector<16x32xf32>
    %7 = arith.subf %1, %6 : vector<16x32xf32>
    %8 = arith.mulf %7, %7 : vector<16x32xf32>
    %cst_3 = arith.constant dense<0.000000e+00> : vector<16xf32>
    %9 = vector.multi_reduction <add>, %8, %cst_3 [1] : vector<16x32xf32> to vector<16xf32>
    %10 = vector.shape_cast %9 : vector<16xf32> to vector<16x1xf32>
    %cst_4 = arith.constant 3.200000e+01 : f32
    %11 = vector.broadcast %cst_4 : f32 to vector<16x1xf32>
    %12 = arith.divf %10, %11 : vector<16x1xf32>
    %13 = vector.broadcast %5 : vector<16x1xf32> to vector<16x32xf32>
    %14 = arith.subf %1, %13 : vector<16x32xf32>
    %cst_5 = arith.constant 9.99999997E-7 : f32
    %15 = vector.broadcast %cst_5 : f32 to vector<16x1xf32>
    %16 = arith.addf %12, %15 : vector<16x1xf32>
    %17 = math.rsqrt %16 : vector<16x1xf32>
    %18 = vector.broadcast %17 : vector<16x1xf32> to vector<16x32xf32>
    %19 = arith.mulf %14, %18 : vector<16x32xf32>
    %c0_6 = arith.constant 0 : index
    %c0_7 = arith.constant 0 : index
    %20 = vector.load %arg8[%c0_6, %c0_7] : memref<1x32xf32, #tpu.memory_space<vmem>>, vector<1x32xf32>
    %21 = vector.broadcast %20 : vector<1x32xf32> to vector<16x32xf32>
    %22 = arith.mulf %19, %21 : vector<16x32xf32>
    %c0_8 = arith.constant 0 : index
    %c0_9 = arith.constant 0 : index
    %23 = vector.load %arg9[%c0_8, %c0_9] : memref<1x32xf32, #tpu.memory_space<vmem>>, vector<1x32xf32>
    %24 = vector.broadcast %23 : vector<1x32xf32> to vector<16x32xf32>
    %25 = arith.addf %22, %24 : vector<16x32xf32>
    %26 = arith.truncf %25 : vector<16x32xf32> to vector<16x32xbf16>
    %cst_10 = arith.constant 0.000000e+00 : f32
    %27 = vector.broadcast %cst_10 : f32 to vector<16x32xf32>
    %c0_11 = arith.constant 0 : index
    %c0_12 = arith.constant 0 : index
    %c0_13 = arith.constant 0 : index
    %28 = vector.load %arg3[%c0_11, %c0_12, %c0_13] : memref<4x32x16xbf16, #tpu.memory_space<vmem>>, vector<1x32x16xbf16>
    %29 = vector.shape_cast %28 : vector<1x32x16xbf16> to vector<32x16xbf16>
    %cst_14 = arith.constant dense<0.000000e+00> : vector<16x16xf32>
    %30 = tpu.matmul %26, %29, %cst_14 {dimension_numbers = #tpu.dot_dimension_numbers<[1], [0], [0], [1], [0, 0, 1, 1], [], []>} : vector<16x32xbf16>, vector<32x16xbf16>, vector<16x16xf32> -> vector<16x16xf32>
    %31 = vector.extract_strided_slice %30 {offsets = [0, 0], sizes = [16, 8], strides = [1, 1]} : vector<16x16xf32> to vector<16x8xf32>
    %c0_15 = arith.constant 0 : index
    %c0_16 = arith.constant 0 : index
    %c0_17 = arith.constant 0 : index
    %32 = vector.load %arg4[%c0_15, %c0_16, %c0_17] : memref<4x16x8xf32, #tpu.memory_space<vmem>>, vector<1x16x8xf32>
    %33 = vector.shape_cast %32 : vector<1x16x8xf32> to vector<16x8xf32>
    %34 = arith.addf %31, %33 : vector<16x8xf32>
    %35 = arith.truncf %34 : vector<16x8xf32> to vector<16x8xbf16>
    %36 = vector.extract_strided_slice %30 {offsets = [0, 8], sizes = [16, 8], strides = [1, 1]} : vector<16x16xf32> to vector<16x8xf32>
    %c0_18 = arith.constant 0 : index
    %c0_19 = arith.constant 0 : index
    %c0_20 = arith.constant 0 : index
    %37 = vector.load %arg5[%c0_18, %c0_19, %c0_20] : memref<4x1x8xf32, #tpu.memory_space<vmem>>, vector<1x1x8xf32>
    %38 = vector.shape_cast %37 : vector<1x1x8xf32> to vector<1x8xf32>
    %39 = vector.broadcast %38 : vector<1x8xf32> to vector<16x8xf32>
    %40 = arith.addf %36, %39 : vector<16x8xf32>
    %41 = arith.truncf %40 : vector<16x8xf32> to vector<16x8xbf16>
    %c0_21 = arith.constant 0 : index
    %c0_22 = arith.constant 0 : index
    %c0_23 = arith.constant 0 : index
    %42 = vector.load %arg2[%c0_21, %c0_22, %c0_23] : memref<4x16x8xbf16, #tpu.memory_space<vmem>>, vector<1x16x8xbf16>
    %43 = vector.shape_cast %42 : vector<1x16x8xbf16> to vector<16x8xbf16>
    "tpu.trace_start"() <{level = 10 : i32, message = "qd,sd->qs"}> : () -> ()
    %cst_24 = arith.constant dense<0.000000e+00> : vector<16x16xf32>
    %44 = tpu.matmul %43, %35, %cst_24 {dimension_numbers = #tpu.dot_dimension_numbers<[1], [1], [0], [0], [0, 0, 1, 0], [], []>} : vector<16x8xbf16>, vector<16x8xbf16>, vector<16x16xf32> -> vector<16x16xf32>
    "tpu.trace_stop"() : () -> ()
    %cst_25 = arith.constant dense<0xFF800000> : vector<16xf32>
    %45 = vector.multi_reduction <maximumf>, %44, %cst_25 [1] : vector<16x16xf32> to vector<16xf32>
    %46 = vector.shape_cast %45 : vector<16xf32> to vector<16x1xf32>
    %47 = vector.broadcast %46 : vector<16x1xf32> to vector<16x16xf32>
    %48 = arith.subf %44, %47 : vector<16x16xf32>
    %49 = math.exp %48 : vector<16x16xf32>
    %cst_26 = arith.constant dense<0.000000e+00> : vector<16xf32>
    %50 = vector.multi_reduction <add>, %49, %cst_26 [1] : vector<16x16xf32> to vector<16xf32>
    %51 = vector.shape_cast %50 : vector<16xf32> to vector<16x1xf32>
    %52 = tpu.reciprocal %51 {approx = true} : vector<16x1xf32> -> vector<16x1xf32>
    %53 = vector.broadcast %52 : vector<16x1xf32> to vector<16x16xf32>
    %54 = arith.mulf %49, %53 : vector<16x16xf32>
    %55 = arith.truncf %54 : vector<16x16xf32> to vector<16x16xbf16>
    %cst_27 = arith.constant dense<0.000000e+00> : vector<16x8xf32>
    %56 = tpu.matmul %55, %41, %cst_27 {dimension_numbers = #tpu.dot_dimension_numbers<[1], [0], [0], [1], [0, 0, 1, 1], [], []>} : vector<16x16xbf16>, vector<16x8xbf16>, vector<16x8xf32> -> vector<16x8xf32>
    %57 = arith.truncf %56 : vector<16x8xf32> to vector<16x8xbf16>
    %c0_28 = arith.constant 0 : index
    %c0_29 = arith.constant 0 : index
    %c0_30 = arith.constant 0 : index
    %58 = vector.load %arg6[%c0_28, %c0_29, %c0_30] : memref<4x8x32xbf16, #tpu.memory_space<vmem>>, vector<1x8x32xbf16>
    %59 = vector.shape_cast %58 : vector<1x8x32xbf16> to vector<8x32xbf16>
    %cst_31 = arith.constant dense<0.000000e+00> : vector<16x32xf32>
    %60 = tpu.matmul %57, %59, %cst_31 {dimension_numbers = #tpu.dot_dimension_numbers<[1], [0], [0], [1], [0, 0, 1, 1], [], []>} : vector<16x8xbf16>, vector<8x32xbf16>, vector<16x32xf32> -> vector<16x32xf32>
    %61 = arith.addf %27, %60 : vector<16x32xf32>
    %c1 = arith.constant 1 : index
    %c0_32 = arith.constant 0 : index
    %c0_33 = arith.constant 0 : index
    %62 = vector.load %arg3[%c1, %c0_32, %c0_33] : memref<4x32x16xbf16, #tpu.memory_space<vmem>>, vector<1x32x16xbf16>
    %63 = vector.shape_cast %62 : vector<1x32x16xbf16> to vector<32x16xbf16>
    %cst_34 = arith.constant dense<0.000000e+00> : vector<16x16xf32>
    %64 = tpu.matmul %26, %63, %cst_34 {dimension_numbers = #tpu.dot_dimension_numbers<[1], [0], [0], [1], [0, 0, 1, 1], [], []>} : vector<16x32xbf16>, vector<32x16xbf16>, vector<16x16xf32> -> vector<16x16xf32>
    %65 = vector.extract_strided_slice %64 {offsets = [0, 0], sizes = [16, 8], strides = [1, 1]} : vector<16x16xf32> to vector<16x8xf32>
    %c1_35 = arith.constant 1 : index
    %c0_36 = arith.constant 0 : index
    %c0_37 = arith.constant 0 : index
    %66 = vector.load %arg4[%c1_35, %c0_36, %c0_37] : memref<4x16x8xf32, #tpu.memory_space<vmem>>, vector<1x16x8xf32>
    %67 = vector.shape_cast %66 : vector<1x16x8xf32> to vector<16x8xf32>
    %68 = arith.addf %65, %67 : vector<16x8xf32>
    %69 = arith.truncf %68 : vector<16x8xf32> to vector<16x8xbf16>
    %70 = vector.extract_strided_slice %64 {offsets = [0, 8], sizes = [16, 8], strides = [1, 1]} : vector<16x16xf32> to vector<16x8xf32>
    %c1_38 = arith.constant 1 : index
    %c0_39 = arith.constant 0 : index
    %c0_40 = arith.constant 0 : index
    %71 = vector.load %arg5[%c1_38, %c0_39, %c0_40] : memref<4x1x8xf32, #tpu.memory_space<vmem>>, vector<1x1x8xf32>
    %72 = vector.shape_cast %71 : vector<1x1x8xf32> to vector<1x8xf32>
    %73 = vector.broadcast %72 : vector<1x8xf32> to vector<16x8xf32>
    %74 = arith.addf %70, %73 : vector<16x8xf32>
    %75 = arith.truncf %74 : vector<16x8xf32> to vector<16x8xbf16>
    %c1_41 = arith.constant 1 : index
    %c0_42 = arith.constant 0 : index
    %c0_43 = arith.constant 0 : index
    %76 = vector.load %arg2[%c1_41, %c0_42, %c0_43] : memref<4x16x8xbf16, #tpu.memory_space<vmem>>, vector<1x16x8xbf16>
    %77 = vector.shape_cast %76 : vector<1x16x8xbf16> to vector<16x8xbf16>
    "tpu.trace_start"() <{level = 10 : i32, message = "qd,sd->qs"}> : () -> ()
    %cst_44 = arith.constant dense<0.000000e+00> : vector<16x16xf32>
    %78 = tpu.matmul %77, %69, %cst_44 {dimension_numbers = #tpu.dot_dimension_numbers<[1], [1], [0], [0], [0, 0, 1, 0], [], []>} : vector<16x8xbf16>, vector<16x8xbf16>, vector<16x16xf32> -> vector<16x16xf32>
    "tpu.trace_stop"() : () -> ()
    %cst_45 = arith.constant dense<0xFF800000> : vector<16xf32>
    %79 = vector.multi_reduction <maximumf>, %78, %cst_45 [1] : vector<16x16xf32> to vector<16xf32>
    %80 = vector.shape_cast %79 : vector<16xf32> to vector<16x1xf32>
    %81 = vector.broadcast %80 : vector<16x1xf32> to vector<16x16xf32>
    %82 = arith.subf %78, %81 : vector<16x16xf32>
    %83 = math.exp %82 : vector<16x16xf32>
    %cst_46 = arith.constant dense<0.000000e+00> : vector<16xf32>
    %84 = vector.multi_reduction <add>, %83, %cst_46 [1] : vector<16x16xf32> to vector<16xf32>
    %85 = vector.shape_cast %84 : vector<16xf32> to vector<16x1xf32>
    %86 = tpu.reciprocal %85 {approx = true} : vector<16x1xf32> -> vector<16x1xf32>
    %87 = vector.broadcast %86 : vector<16x1xf32> to vector<16x16xf32>
    %88 = arith.mulf %83, %87 : vector<16x16xf32>
    %89 = arith.truncf %88 : vector<16x16xf32> to vector<16x16xbf16>
    %cst_47 = arith.constant dense<0.000000e+00> : vector<16x8xf32>
    %90 = tpu.matmul %89, %75, %cst_47 {dimension_numbers = #tpu.dot_dimension_numbers<[1], [0], [0], [1], [0, 0, 1, 1], [], []>} : vector<16x16xbf16>, vector<16x8xbf16>, vector<16x8xf32> -> vector<16x8xf32>
    %91 = arith.truncf %90 : vector<16x8xf32> to vector<16x8xbf16>
    %c1_48 = arith.constant 1 : index
    %c0_49 = arith.constant 0 : index
    %c0_50 = arith.constant 0 : index
    %92 = vector.load %arg6[%c1_48, %c0_49, %c0_50] : memref<4x8x32xbf16, #tpu.memory_space<vmem>>, vector<1x8x32xbf16>
    %93 = vector.shape_cast %92 : vector<1x8x32xbf16> to vector<8x32xbf16>
    %cst_51 = arith.constant dense<0.000000e+00> : vector<16x32xf32>
    %94 = tpu.matmul %91, %93, %cst_51 {dimension_numbers = #tpu.dot_dimension_numbers<[1], [0], [0], [1], [0, 0, 1, 1], [], []>} : vector<16x8xbf16>, vector<8x32xbf16>, vector<16x32xf32> -> vector<16x32xf32>
    %95 = arith.addf %61, %94 : vector<16x32xf32>
    %c2 = arith.constant 2 : index
    %c0_52 = arith.constant 0 : index
    %c0_53 = arith.constant 0 : index
    %96 = vector.load %arg3[%c2, %c0_52, %c0_53] : memref<4x32x16xbf16, #tpu.memory_space<vmem>>, vector<1x32x16xbf16>
    %97 = vector.shape_cast %96 : vector<1x32x16xbf16> to vector<32x16xbf16>
    %cst_54 = arith.constant dense<0.000000e+00> : vector<16x16xf32>
    %98 = tpu.matmul %26, %97, %cst_54 {dimension_numbers = #tpu.dot_dimension_numbers<[1], [0], [0], [1], [0, 0, 1, 1], [], []>} : vector<16x32xbf16>, vector<32x16xbf16>, vector<16x16xf32> -> vector<16x16xf32>
    %99 = vector.extract_strided_slice %98 {offsets = [0, 0], sizes = [16, 8], strides = [1, 1]} : vector<16x16xf32> to vector<16x8xf32>
    %c2_55 = arith.constant 2 : index
    %c0_56 = arith.constant 0 : index
    %c0_57 = arith.constant 0 : index
    %100 = vector.load %arg4[%c2_55, %c0_56, %c0_57] : memref<4x16x8xf32, #tpu.memory_space<vmem>>, vector<1x16x8xf32>
    %101 = vector.shape_cast %100 : vector<1x16x8xf32> to vector<16x8xf32>
    %102 = arith.addf %99, %101 : vector<16x8xf32>
    %103 = arith.truncf %102 : vector<16x8xf32> to vector<16x8xbf16>
    %104 = vector.extract_strided_slice %98 {offsets = [0, 8], sizes = [16, 8], strides = [1, 1]} : vector<16x16xf32> to vector<16x8xf32>
    %c2_58 = arith.constant 2 : index
    %c0_59 = arith.constant 0 : index
    %c0_60 = arith.constant 0 : index
    %105 = vector.load %arg5[%c2_58, %c0_59, %c0_60] : memref<4x1x8xf32, #tpu.memory_space<vmem>>, vector<1x1x8xf32>
    %106 = vector.shape_cast %105 : vector<1x1x8xf32> to vector<1x8xf32>
    %107 = vector.broadcast %106 : vector<1x8xf32> to vector<16x8xf32>
    %108 = arith.addf %104, %107 : vector<16x8xf32>
    %109 = arith.truncf %108 : vector<16x8xf32> to vector<16x8xbf16>
    %c2_61 = arith.constant 2 : index
    %c0_62 = arith.constant 0 : index
    %c0_63 = arith.constant 0 : index
    %110 = vector.load %arg2[%c2_61, %c0_62, %c0_63] : memref<4x16x8xbf16, #tpu.memory_space<vmem>>, vector<1x16x8xbf16>
    %111 = vector.shape_cast %110 : vector<1x16x8xbf16> to vector<16x8xbf16>
    "tpu.trace_start"() <{level = 10 : i32, message = "qd,sd->qs"}> : () -> ()
    %cst_64 = arith.constant dense<0.000000e+00> : vector<16x16xf32>
    %112 = tpu.matmul %111, %103, %cst_64 {dimension_numbers = #tpu.dot_dimension_numbers<[1], [1], [0], [0], [0, 0, 1, 0], [], []>} : vector<16x8xbf16>, vector<16x8xbf16>, vector<16x16xf32> -> vector<16x16xf32>
    "tpu.trace_stop"() : () -> ()
    %cst_65 = arith.constant dense<0xFF800000> : vector<16xf32>
    %113 = vector.multi_reduction <maximumf>, %112, %cst_65 [1] : vector<16x16xf32> to vector<16xf32>
    %114 = vector.shape_cast %113 : vector<16xf32> to vector<16x1xf32>
    %115 = vector.broadcast %114 : vector<16x1xf32> to vector<16x16xf32>
    %116 = arith.subf %112, %115 : vector<16x16xf32>
    %117 = math.exp %116 : vector<16x16xf32>
    %cst_66 = arith.constant dense<0.000000e+00> : vector<16xf32>
    %118 = vector.multi_reduction <add>, %117, %cst_66 [1] : vector<16x16xf32> to vector<16xf32>
    %119 = vector.shape_cast %118 : vector<16xf32> to vector<16x1xf32>
    %120 = tpu.reciprocal %119 {approx = true} : vector<16x1xf32> -> vector<16x1xf32>
    %121 = vector.broadcast %120 : vector<16x1xf32> to vector<16x16xf32>
    %122 = arith.mulf %117, %121 : vector<16x16xf32>
    %123 = arith.truncf %122 : vector<16x16xf32> to vector<16x16xbf16>
    %cst_67 = arith.constant dense<0.000000e+00> : vector<16x8xf32>
    %124 = tpu.matmul %123, %109, %cst_67 {dimension_numbers = #tpu.dot_dimension_numbers<[1], [0], [0], [1], [0, 0, 1, 1], [], []>} : vector<16x16xbf16>, vector<16x8xbf16>, vector<16x8xf32> -> vector<16x8xf32>
    %125 = arith.truncf %124 : vector<16x8xf32> to vector<16x8xbf16>
    %c2_68 = arith.constant 2 : index
    %c0_69 = arith.constant 0 : index
    %c0_70 = arith.constant 0 : index
    %126 = vector.load %arg6[%c2_68, %c0_69, %c0_70] : memref<4x8x32xbf16, #tpu.memory_space<vmem>>, vector<1x8x32xbf16>
    %127 = vector.shape_cast %126 : vector<1x8x32xbf16> to vector<8x32xbf16>
    %cst_71 = arith.constant dense<0.000000e+00> : vector<16x32xf32>
    %128 = tpu.matmul %125, %127, %cst_71 {dimension_numbers = #tpu.dot_dimension_numbers<[1], [0], [0], [1], [0, 0, 1, 1], [], []>} : vector<16x8xbf16>, vector<8x32xbf16>, vector<16x32xf32> -> vector<16x32xf32>
    %129 = arith.addf %95, %128 : vector<16x32xf32>
    %c3 = arith.constant 3 : index
    %c0_72 = arith.constant 0 : index
    %c0_73 = arith.constant 0 : index
    %130 = vector.load %arg3[%c3, %c0_72, %c0_73] : memref<4x32x16xbf16, #tpu.memory_space<vmem>>, vector<1x32x16xbf16>
    %131 = vector.shape_cast %130 : vector<1x32x16xbf16> to vector<32x16xbf16>
    %cst_74 = arith.constant dense<0.000000e+00> : vector<16x16xf32>
    %132 = tpu.matmul %26, %131, %cst_74 {dimension_numbers = #tpu.dot_dimension_numbers<[1], [0], [0], [1], [0, 0, 1, 1], [], []>} : vector<16x32xbf16>, vector<32x16xbf16>, vector<16x16xf32> -> vector<16x16xf32>
    %133 = vector.extract_strided_slice %132 {offsets = [0, 0], sizes = [16, 8], strides = [1, 1]} : vector<16x16xf32> to vector<16x8xf32>
    %c3_75 = arith.constant 3 : index
    %c0_76 = arith.constant 0 : index
    %c0_77 = arith.constant 0 : index
    %134 = vector.load %arg4[%c3_75, %c0_76, %c0_77] : memref<4x16x8xf32, #tpu.memory_space<vmem>>, vector<1x16x8xf32>
    %135 = vector.shape_cast %134 : vector<1x16x8xf32> to vector<16x8xf32>
    %136 = arith.addf %133, %135 : vector<16x8xf32>
    %137 = arith.truncf %136 : vector<16x8xf32> to vector<16x8xbf16>
    %138 = vector.extract_strided_slice %132 {offsets = [0, 8], sizes = [16, 8], strides = [1, 1]} : vector<16x16xf32> to vector<16x8xf32>
    %c3_78 = arith.constant 3 : index
    %c0_79 = arith.constant 0 : index
    %c0_80 = arith.constant 0 : index
    %139 = vector.load %arg5[%c3_78, %c0_79, %c0_80] : memref<4x1x8xf32, #tpu.memory_space<vmem>>, vector<1x1x8xf32>
    %140 = vector.shape_cast %139 : vector<1x1x8xf32> to vector<1x8xf32>
    %141 = vector.broadcast %140 : vector<1x8xf32> to vector<16x8xf32>
    %142 = arith.addf %138, %141 : vector<16x8xf32>
    %143 = arith.truncf %142 : vector<16x8xf32> to vector<16x8xbf16>
    %c3_81 = arith.constant 3 : index
    %c0_82 = arith.constant 0 : index
    %c0_83 = arith.constant 0 : index
    %144 = vector.load %arg2[%c3_81, %c0_82, %c0_83] : memref<4x16x8xbf16, #tpu.memory_space<vmem>>, vector<1x16x8xbf16>
    %145 = vector.shape_cast %144 : vector<1x16x8xbf16> to vector<16x8xbf16>
    "tpu.trace_start"() <{level = 10 : i32, message = "qd,sd->qs"}> : () -> ()
    %cst_84 = arith.constant dense<0.000000e+00> : vector<16x16xf32>
    %146 = tpu.matmul %145, %137, %cst_84 {dimension_numbers = #tpu.dot_dimension_numbers<[1], [1], [0], [0], [0, 0, 1, 0], [], []>} : vector<16x8xbf16>, vector<16x8xbf16>, vector<16x16xf32> -> vector<16x16xf32>
    "tpu.trace_stop"() : () -> ()
    %cst_85 = arith.constant dense<0xFF800000> : vector<16xf32>
    %147 = vector.multi_reduction <maximumf>, %146, %cst_85 [1] : vector<16x16xf32> to vector<16xf32>
    %148 = vector.shape_cast %147 : vector<16xf32> to vector<16x1xf32>
    %149 = vector.broadcast %148 : vector<16x1xf32> to vector<16x16xf32>
    %150 = arith.subf %146, %149 : vector<16x16xf32>
    %151 = math.exp %150 : vector<16x16xf32>
    %cst_86 = arith.constant dense<0.000000e+00> : vector<16xf32>
    %152 = vector.multi_reduction <add>, %151, %cst_86 [1] : vector<16x16xf32> to vector<16xf32>
    %153 = vector.shape_cast %152 : vector<16xf32> to vector<16x1xf32>
    %154 = tpu.reciprocal %153 {approx = true} : vector<16x1xf32> -> vector<16x1xf32>
    %155 = vector.broadcast %154 : vector<16x1xf32> to vector<16x16xf32>
    %156 = arith.mulf %151, %155 : vector<16x16xf32>
    %157 = arith.truncf %156 : vector<16x16xf32> to vector<16x16xbf16>
    %cst_87 = arith.constant dense<0.000000e+00> : vector<16x8xf32>
    %158 = tpu.matmul %157, %143, %cst_87 {dimension_numbers = #tpu.dot_dimension_numbers<[1], [0], [0], [1], [0, 0, 1, 1], [], []>} : vector<16x16xbf16>, vector<16x8xbf16>, vector<16x8xf32> -> vector<16x8xf32>
    %159 = arith.truncf %158 : vector<16x8xf32> to vector<16x8xbf16>
    %c3_88 = arith.constant 3 : index
    %c0_89 = arith.constant 0 : index
    %c0_90 = arith.constant 0 : index
    %160 = vector.load %arg6[%c3_88, %c0_89, %c0_90] : memref<4x8x32xbf16, #tpu.memory_space<vmem>>, vector<1x8x32xbf16>
    %161 = vector.shape_cast %160 : vector<1x8x32xbf16> to vector<8x32xbf16>
    %cst_91 = arith.constant dense<0.000000e+00> : vector<16x32xf32>
    %162 = tpu.matmul %159, %161, %cst_91 {dimension_numbers = #tpu.dot_dimension_numbers<[1], [0], [0], [1], [0, 0, 1, 1], [], []>} : vector<16x8xbf16>, vector<8x32xbf16>, vector<16x32xf32> -> vector<16x32xf32>
    %163 = arith.addf %129, %162 : vector<16x32xf32>
    %c0_92 = arith.constant 0 : index
    %c0_93 = arith.constant 0 : index
    %164 = vector.load %arg7[%c0_92, %c0_93] : memref<1x32xf32, #tpu.memory_space<vmem>>, vector<1x32xf32>
    %165 = vector.broadcast %164 : vector<1x32xf32> to vector<16x32xf32>
    %166 = arith.addf %163, %165 : vector<16x32xf32>
    %cst_94 = arith.constant dense<0.000000e+00> : vector<16xf32>
    %167 = vector.multi_reduction <add>, %166, %cst_94 [1] : vector<16x32xf32> to vector<16xf32>
    %168 = vector.shape_cast %167 : vector<16xf32> to vector<16x1xf32>
    %cst_95 = arith.constant 3.200000e+01 : f32
    %169 = vector.broadcast %cst_95 : f32 to vector<16x1xf32>
    %170 = arith.divf %168, %169 : vector<16x1xf32>
    %171 = vector.broadcast %170 : vector<16x1xf32> to vector<16x32xf32>
    %172 = arith.subf %166, %171 : vector<16x32xf32>
    %173 = arith.mulf %172, %172 : vector<16x32xf32>
    %cst_96 = arith.constant dense<0.000000e+00> : vector<16xf32>
    %174 = vector.multi_reduction <add>, %173, %cst_96 [1] : vector<16x32xf32> to vector<16xf32>
    %175 = vector.shape_cast %174 : vector<16xf32> to vector<16x1xf32>
    %cst_97 = arith.constant 3.200000e+01 : f32
    %176 = vector.broadcast %cst_97 : f32 to vector<16x1xf32>
    %177 = arith.divf %175, %176 : vector<16x1xf32>
    %178 = vector.broadcast %170 : vector<16x1xf32> to vector<16x32xf32>
    %179 = arith.subf %166, %178 : vector<16x32xf32>
    %cst_98 = arith.constant 9.99999997E-7 : f32
    %180 = vector.broadcast %cst_98 : f32 to vector<16x1xf32>
    %181 = arith.addf %177, %180 : vector<16x1xf32>
    %182 = math.rsqrt %181 : vector<16x1xf32>
    %183 = vector.broadcast %182 : vector<16x1xf32> to vector<16x32xf32>
    %184 = arith.mulf %179, %183 : vector<16x32xf32>
    %c0_99 = arith.constant 0 : index
    %c0_100 = arith.constant 0 : index
    %185 = vector.load %arg10[%c0_99, %c0_100] : memref<1x32xf32, #tpu.memory_space<vmem>>, vector<1x32xf32>
    %186 = vector.broadcast %185 : vector<1x32xf32> to vector<16x32xf32>
    %187 = arith.mulf %184, %186 : vector<16x32xf32>
    %c0_101 = arith.constant 0 : index
    %c0_102 = arith.constant 0 : index
    %188 = vector.load %arg11[%c0_101, %c0_102] : memref<1x32xf32, #tpu.memory_space<vmem>>, vector<1x32xf32>
    %189 = vector.broadcast %188 : vector<1x32xf32> to vector<16x32xf32>
    %190 = arith.addf %187, %189 : vector<16x32xf32>
    %c0_103 = arith.constant 0 : index
    %c0_104 = arith.constant 0 : index
    %c0_105 = arith.constant 0 : index
    %191 = vector.load %arg12[%c0_103, %c0_104, %c0_105] : memref<1x16x32xf32, #tpu.memory_space<vmem>>, vector<1x16x32xf32>
    %192 = vector.shape_cast %191 : vector<1x16x32xf32> to vector<16x32xf32>
    %193 = vector.shape_cast %190 : vector<16x32xf32> to vector<1x16x32xf32>
    tpu.vector_store %arg12[%c0_103, %c0_104, %c0_105], %193 {strides = array<i32>} : memref<1x16x32xf32, #tpu.memory_space<vmem>>, vector<1x16x32xf32>,
    return
  }
  func.func @transform_0(%arg0: i32) -> (i32, i32, i32) {
    %c0_i32 = arith.constant 0 : i32
    %c0_i32_0 = arith.constant 0 : i32
    %c0_i32_1 = arith.constant 0 : i32
    return %arg0, %c0_i32, %c0_i32_0 : i32, i32, i32
  }
  func.func @transform_1(%arg0: i32) -> (i32, i32, i32) {
    %c0_i32 = arith.constant 0 : i32
    %c0_i32_0 = arith.constant 0 : i32
    %c0_i32_1 = arith.constant 0 : i32
    %c0_i32_2 = arith.constant 0 : i32
    return %c0_i32, %c0_i32_0, %c0_i32_1 : i32, i32, i32
  }
  func.func @transform_2(%arg0: i32) -> (i32, i32, i32) {
    %c0_i32 = arith.constant 0 : i32
    %c0_i32_0 = arith.constant 0 : i32
    %c0_i32_1 = arith.constant 0 : i32
    %c0_i32_2 = arith.constant 0 : i32
    return %c0_i32, %c0_i32_0, %c0_i32_1 : i32, i32, i32
  }
  func.func @transform_3(%arg0: i32) -> (i32, i32, i32) {
    %c0_i32 = arith.constant 0 : i32
    %c0_i32_0 = arith.constant 0 : i32
    %c0_i32_1 = arith.constant 0 : i32
    %c0_i32_2 = arith.constant 0 : i32
    return %c0_i32, %c0_i32_0, %c0_i32_1 : i32, i32, i32
  }
  func.func @transform_4(%arg0: i32) -> (i32, i32, i32) {
    %c0_i32 = arith.constant 0 : i32
    %c0_i32_0 = arith.constant 0 : i32
    %c0_i32_1 = arith.constant 0 : i32
    %c0_i32_2 = arith.constant 0 : i32
    return %c0_i32, %c0_i32_0, %c0_i32_1 : i32, i32, i32
  }
  func.func @transform_5(%arg0: i32) -> (i32, i32, i32) {
    %c0_i32 = arith.constant 0 : i32
    %c0_i32_0 = arith.constant 0 : i32
    %c0_i32_1 = arith.constant 0 : i32
    %c0_i32_2 = arith.constant 0 : i32
    return %c0_i32, %c0_i32_0, %c0_i32_1 : i32, i32, i32
  }
  func.func @transform_6(%arg0: i32) -> (i32, i32) {
    %c0_i32 = arith.constant 0 : i32
    %c0_i32_0 = arith.constant 0 : i32
    %c0_i32_1 = arith.constant 0 : i32
    return %c0_i32, %c0_i32_0 : i32, i32
  }
  func.func @transform_7(%arg0: i32) -> (i32, i32) {
    %c0_i32 = arith.constant 0 : i32
    %c0_i32_0 = arith.constant 0 : i32
    %c0_i32_1 = arith.constant 0 : i32
    return %c0_i32, %c0_i32_0 : i32, i32
  }
  func.func @transform_8(%arg0: i32) -> (i32, i32) {
    %c0_i32 = arith.constant 0 : i32
    %c0_i32_0 = arith.constant 0 : i32
    %c0_i32_1 = arith.constant 0 : i32
    return %c0_i32, %c0_i32_0 : i32, i32
  }
  func.func @transform_9(%arg0: i32) -> (i32, i32) {
    %c0_i32 = arith.constant 0 : i32
    %c0_i32_0 = arith.constant 0 : i32
    %c0_i32_1 = arith.constant 0 : i32
    return %c0_i32, %c0_i32_0 : i32, i32
  }
  func.func @transform_10(%arg0: i32) -> (i32, i32) {
    %c0_i32 = arith.constant 0 : i32
    %c0_i32_0 = arith.constant 0 : i32
    %c0_i32_1 = arith.constant 0 : i32
    return %c0_i32, %c0_i32_0 : i32, i32
  }
  func.func @transform_11(%arg0: i32) -> (i32, i32, i32) {
    %c0_i32 = arith.constant 0 : i32
    %c0_i32_0 = arith.constant 0 : i32
    %c0_i32_1 = arith.constant 0 : i32
    return %arg0, %c0_i32, %c0_i32_0 : i32, i32, i32
  }
}

</mosaic_0001>

<llo_original>
// kernel: tpu_custom_call.1
$region0: #{tpu_custom_call.1}
  #allocation0 [shape = 'u32[]', space=smem, size = 0x4, offset = 0x4, fixed_abs, tag = 'smem constant byte address 0x4 - core index']
  #allocation1 [shape = 'u32[72,128]{1,0:T(1,128)}', space=vmem, size = 0x9000, scoped, tag = 'internal scratch']
  %s0 = inlined_call_operand.vmem [shape: f32[2,16,32], index: 0, kind: input, shape index: {}]
  %s1 = inlined_call_operand.vmem [shape: bf16[4,16,8], index: 1, kind: input, shape index: {}]
  %s2 = inlined_call_operand.vmem [shape: bf16[4,32,16], index: 2, kind: input, shape index: {}]
  %s3 = inlined_call_operand.vmem [shape: f32[4,16,8], index: 3, kind: input, shape index: {}]
  %s4 = inlined_call_operand.vmem [shape: f32[4,1,8], index: 4, kind: input, shape index: {}]
  %s5 = inlined_call_operand.vmem [shape: bf16[4,8,32], index: 5, kind: input, shape index: {}]
  %s6 = inlined_call_operand.vmem [shape: f32[1,32], index: 6, kind: input, shape index: {}]
  %s7 = inlined_call_operand.vmem [shape: f32[1,32], index: 7, kind: input, shape index: {}]
  %s8 = inlined_call_operand.vmem [shape: f32[1,32], index: 8, kind: input, shape index: {}]
  %s9 = inlined_call_operand.vmem [shape: f32[1,32], index: 9, kind: input, shape index: {}]
  %s10 = inlined_call_operand.vmem [shape: f32[1,32], index: 10, kind: input, shape index: {}]
  %s11 = inlined_call_operand.hbm [shape: f32[2,16,32], index: 11, kind: output, shape index: {}]
  %s12 = sld [smem:[#allocation0]]
  $region77: #{tpu_custom_call.1} parent=0
    _
  %s14 = ssub.s32 1, %s12
  %s15 = scalar_select 0, %s14, %s12
  $region1: #{tpu_custom_call.1} parent=0
    #allocation2 [shape = 'u8[16384]{0}', space=vmem, size = 0x4000, scoped, tag = 'output window, operand 0']
    #allocation3 [shape = 's32[2]{0}', space=sflag, size = 0x8, scoped, tag = 'scoped memory for tpu_custom_call.1']
    %16 = vsyncpa [#allocation3], 0
    %s17 = scalar_lea.sflag [#allocation3], 1
    %18 = vsyncpa %s17, 0
    loop: start=0, step=1, limit=4
    $region2: #{tpu_custom_call.1} parent=1 // loop_pre_header
      _
    $region3: #{tpu_custom_call.1} parent=1 // loop_header
      %s20 = sphi 0, %s24
      %p21 = scmp.ge.s32.totalorder %s20, 4
      %s30 = sphi 0, %s32
      %s33 = sphi 0, %s30
      %s34 = sphi 0, %s33
      %s50 = sphi 0, %s34
      %s54 = sphi 0, %s54
      %s56 = sphi 0, %s54
      %s57 = sphi 0, %s56
      %s71 = sphi 0, %s57
      %s75 = sphi 0, %s75
      %s77 = sphi 0, %s75
      %s78 = sphi 0, %s77
      %s92 = sphi 0, %s78
      %s96 = sphi 0, %s96
      %s98 = sphi 0, %s96
      %s99 = sphi 0, %s98
      %s113 = sphi 0, %s99
      %s117 = sphi 0, %s117
      %s119 = sphi 0, %s117
      %s120 = sphi 0, %s119
      %s134 = sphi 0, %s120
      %s138 = sphi 0, %s138
      %s140 = sphi 0, %s138
      %s141 = sphi 0, %s140
      %s155 = sphi 0, %s141
      %s159 = sphi 0, %s159
      %s161 = sphi 0, %s159
      %s162 = sphi 0, %s161
      %s176 = sphi 0, %s162
      %s180 = sphi 0, %s180
      %s182 = sphi 0, %s180
      %s183 = sphi 0, %s182
      %s197 = sphi 0, %s183
      %s201 = sphi 0, %s201
      %s203 = sphi 0, %s201
      %s204 = sphi 0, %s203
      %s218 = sphi 0, %s204
      %s222 = sphi 0, %s222
      %s224 = sphi 0, %s222
      %s225 = sphi 0, %s224
      %s239 = sphi 0, %s225
      %s243 = sphi 0, %s243
      %s245 = sphi 0, %s243
      %s246 = sphi 0, %s245
      %s260 = sphi 0, %s246
      %s266 = sphi 0, %s268
      %s269 = sphi 0, %s266
      %s270 = sphi 0, %s269
      %s286 = sphi 0, %s270
    $region4: #{tpu_custom_call.1} parent=1 // loop_header_branch
      %23 = sbr.rel (%p21) target = $region8
    $region5: #{tpu_custom_call.1} parent=1 // loop_body
      %s25 = ssub.s32 %s20, 1
      %s26 = ssub.s32 %s20, 2
      %s27 = sadd.s32 %s20, 1
      %s28 = ssub.s32 %s20, %s27
      %p29 = scmp.eq.s32.totalorder %s28, 0
      %s31 = sadd.s32 %s30, 1
      %s32 = scalar_select %p29, %s30, %s31
      %p35 = pneg %p29
      %p36 = scmp.eq.s32.totalorder %s20, 1
      %p37 = por %p35, %p36
      %p38 = scmp.ne.s32.totalorder %s30, %s33
      %p39 = scmp.eq.s32.totalorder %s20, 0
      %p40 = por %p38, %p39
      %p41 = scmp.ne.s32.totalorder %s30, %s33
      %p42 = scmp.eq.s32.totalorder %s25, 1
      %p43 = por %p41, %p42
      %p44 = scmp.ne.s32.totalorder %s33, %s34
      %p45 = scmp.eq.s32.totalorder %s25, 0
      %p46 = por %p44, %p45
      %p47 = scmp.ne.s32.totalorder %s33, %s34
      %p48 = scmp.eq.s32.totalorder %s26, 1
      %p49 = por %p47, %p48
      %p51 = scmp.ne.s32.totalorder %s34, %s50
      %p52 = scmp.eq.s32.totalorder %s26, 0
      %p53 = por %p51, %p52
      %s55 = sadd.s32 %s54, 1
      %p58 = scmp.eq.s32.totalorder %s20, 1
      %p59 = scmp.ne.s32.totalorder %s54, %s56
      %p60 = scmp.eq.s32.totalorder %s20, 0
      %p61 = por %p59, %p60
      %p62 = scmp.ne.s32.totalorder %s54, %s56
      %p63 = scmp.eq.s32.totalorder %s25, 1
      %p64 = por %p62, %p63
      %p65 = scmp.ne.s32.totalorder %s56, %s57
      %p66 = scmp.eq.s32.totalorder %s25, 0
      %p67 = por %p65, %p66
      %p68 = scmp.ne.s32.totalorder %s56, %s57
      %p69 = scmp.eq.s32.totalorder %s26, 1
      %p70 = por %p68, %p69
      %p72 = scmp.ne.s32.totalorder %s57, %s71
      %p73 = scmp.eq.s32.totalorder %s26, 0
      %p74 = por %p72, %p73
      %s76 = sadd.s32 %s75, 1
      %p79 = scmp.eq.s32.totalorder %s20, 1
      %p80 = scmp.ne.s32.totalorder %s75, %s77
      %p81 = scmp.eq.s32.totalorder %s20, 0
      %p82 = por %p80, %p81
      %p83 = scmp.ne.s32.totalorder %s75, %s77
      %p84 = scmp.eq.s32.totalorder %s25, 1
      %p85 = por %p83, %p84
      %p86 = scmp.ne.s32.totalorder %s77, %s78
      %p87 = scmp.eq.s32.totalorder %s25, 0
      %p88 = por %p86, %p87
      %p89 = scmp.ne.s32.totalorder %s77, %s78
      %p90 = scmp.eq.s32.totalorder %s26, 1
      %p91 = por %p89, %p90
      %p93 = scmp.ne.s32.totalorder %s78, %s92
      %p94 = scmp.eq.s32.totalorder %s26, 0
      %p95 = por %p93, %p94
      %s97 = sadd.s32 %s96, 1
      %p100 = scmp.eq.s32.totalorder %s20, 1
      %p101 = scmp.ne.s32.totalorder %s96, %s98
      %p102 = scmp.eq.s32.totalorder %s20, 0
      %p103 = por %p101, %p102
      %p104 = scmp.ne.s32.totalorder %s96, %s98
      %p105 = scmp.eq.s32.totalorder %s25, 1
      %p106 = por %p104, %p105
      %p107 = scmp.ne.s32.totalorder %s98, %s99
      %p108 = scmp.eq.s32.totalorder %s25, 0
      %p109 = por %p107, %p108
      %p110 = scmp.ne.s32.totalorder %s98, %s99
      %p111 = scmp.eq.s32.totalorder %s26, 1
      %p112 = por %p110, %p111
      %p114 = scmp.ne.s32.totalorder %s99, %s113
      %p115 = scmp.eq.s32.totalorder %s26, 0
      %p116 = por %p114, %p115
      %s118 = sadd.s32 %s117, 1
      %p121 = scmp.eq.s32.totalorder %s20, 1
      %p122 = scmp.ne.s32.totalorder %s117, %s119
      %p123 = scmp.eq.s32.totalorder %s20, 0
      %p124 = por %p122, %p123
      %p125 = scmp.ne.s32.totalorder %s117, %s119
      %p126 = scmp.eq.s32.totalorder %s25, 1
      %p127 = por %p125, %p126
      %p128 = scmp.ne.s32.totalorder %s119, %s120
      %p129 = scmp.eq.s32.totalorder %s25, 0
      %p130 = por %p128, %p129
      %p131 = scmp.ne.s32.totalorder %s119, %s120
      %p132 = scmp.eq.s32.totalorder %s26, 1
      %p133 = por %p131, %p132
      %p135 = scmp.ne.s32.totalorder %s120, %s134
      %p136 = scmp.eq.s32.totalorder %s26, 0
      %p137 = por %p135, %p136
      %s139 = sadd.s32 %s138, 1
      %p142 = scmp.eq.s32.totalorder %s20, 1
      %p143 = scmp.ne.s32.totalorder %s138, %s140
      %p144 = scmp.eq.s32.totalorder %s20, 0
      %p145 = por %p143, %p144
      %p146 = scmp.ne.s32.totalorder %s138, %s140
      %p147 = scmp.eq.s32.totalorder %s25, 1
      %p148 = por %p146, %p147
      %p149 = scmp.ne.s32.totalorder %s140, %s141
      %p150 = scmp.eq.s32.totalorder %s25, 0
      %p151 = por %p149, %p150
      %p152 = scmp.ne.s32.totalorder %s140, %s141
      %p153 = scmp.eq.s32.totalorder %s26, 1
      %p154 = por %p152, %p153
      %p156 = scmp.ne.s32.totalorder %s141, %s155
      %p157 = scmp.eq.s32.totalorder %s26, 0
      %p158 = por %p156, %p157
      %s160 = sadd.s32 %s159, 1
      %p163 = scmp.eq.s32.totalorder %s20, 1
      %p164 = scmp.ne.s32.totalorder %s159, %s161
      %p165 = scmp.eq.s32.totalorder %s20, 0
      %p166 = por %p164, %p165
      %p167 = scmp.ne.s32.totalorder %s159, %s161
      %p168 = scmp.eq.s32.totalorder %s25, 1
      %p169 = por %p167, %p168
      %p170 = scmp.ne.s32.totalorder %s161, %s162
      %p171 = scmp.eq.s32.totalorder %s25, 0
      %p172 = por %p170, %p171
      %p173 = scmp.ne.s32.totalorder %s161, %s162
      %p174 = scmp.eq.s32.totalorder %s26, 1
      %p175 = por %p173, %p174
      %p177 = scmp.ne.s32.totalorder %s162, %s176
      %p178 = scmp.eq.s32.totalorder %s26, 0
      %p179 = por %p177, %p178
      %s181 = sadd.s32 %s180, 1
      %p184 = scmp.eq.s32.totalorder %s20, 1
      %p185 = scmp.ne.s32.totalorder %s180, %s182
      %p186 = scmp.eq.s32.totalorder %s20, 0
      %p187 = por %p185, %p186
      %p188 = scmp.ne.s32.totalorder %s180, %s182
      %p189 = scmp.eq.s32.totalorder %s25, 1
      %p190 = por %p188, %p189
      %p191 = scmp.ne.s32.totalorder %s182, %s183
      %p192 = scmp.eq.s32.totalorder %s25, 0
      %p193 = por %p191, %p192
      %p194 = scmp.ne.s32.totalorder %s182, %s183
      %p195 = scmp.eq.s32.totalorder %s26, 1
      %p196 = por %p194, %p195
      %p198 = scmp.ne.s32.totalorder %s183, %s197
      %p199 = scmp.eq.s32.totalorder %s26, 0
      %p200 = por %p198, %p199
      %s202 = sadd.s32 %s201, 1
      %p205 = scmp.eq.s32.totalorder %s20, 1
      %p206 = scmp.ne.s32.totalorder %s201, %s203
      %p207 = scmp.eq.s32.totalorder %s20, 0
      %p208 = por %p206, %p207
      %p209 = scmp.ne.s32.totalorder %s201, %s203
      %p210 = scmp.eq.s32.totalorder %s25, 1
      %p211 = por %p209, %p210
      %p212 = scmp.ne.s32.totalorder %s203, %s204
      %p213 = scmp.eq.s32.totalorder %s25, 0
      %p214 = por %p212, %p213
      %p215 = scmp.ne.s32.totalorder %s203, %s204
      %p216 = scmp.eq.s32.totalorder %s26, 1
      %p217 = por %p215, %p216
      %p219 = scmp.ne.s32.totalorder %s204, %s218
      %p220 = scmp.eq.s32.totalorder %s26, 0
      %p221 = por %p219, %p220
      %s223 = sadd.s32 %s222, 1
      %p226 = scmp.eq.s32.totalorder %s20, 1
      %p227 = scmp.ne.s32.totalorder %s222, %s224
      %p228 = scmp.eq.s32.totalorder %s20, 0
      %p229 = por %p227, %p228
      %p230 = scmp.ne.s32.totalorder %s222, %s224
      %p231 = scmp.eq.s32.totalorder %s25, 1
      %p232 = por %p230, %p231
      %p233 = scmp.ne.s32.totalorder %s224, %s225
      %p234 = scmp.eq.s32.totalorder %s25, 0
      %p235 = por %p233, %p234
      %p236 = scmp.ne.s32.totalorder %s224, %s225
      %p237 = scmp.eq.s32.totalorder %s26, 1
      %p238 = por %p236, %p237
      %p240 = scmp.ne.s32.totalorder %s225, %s239
      %p241 = scmp.eq.s32.totalorder %s26, 0
      %p242 = por %p240, %p241
      %s244 = sadd.s32 %s243, 1
      %p247 = scmp.eq.s32.totalorder %s20, 1
      %p248 = scmp.ne.s32.totalorder %s243, %s245
      %p249 = scmp.eq.s32.totalorder %s20, 0
      %p250 = por %p248, %p249
      %p251 = scmp.ne.s32.totalorder %s243, %s245
      %p252 = scmp.eq.s32.totalorder %s25, 1
      %p253 = por %p251, %p252
      %p254 = scmp.ne.s32.totalorder %s245, %s246
      %p255 = scmp.eq.s32.totalorder %s25, 0
      %p256 = por %p254, %p255
      %p257 = scmp.ne.s32.totalorder %s245, %s246
      %p258 = scmp.eq.s32.totalorder %s26, 1
      %p259 = por %p257, %p258
      %p261 = scmp.ne.s32.totalorder %s246, %s260
      %p262 = scmp.eq.s32.totalorder %s26, 0
      %p263 = por %p261, %p262
      %s264 = ssub.s32 %s20, %s27
      %p265 = scmp.eq.s32.totalorder %s264, 0
      %s267 = sadd.s32 %s266, 1
      %s268 = scalar_select %p265, %s266, %s267
      %p271 = pneg %p265
      %p272 = scmp.eq.s32.totalorder %s20, 1
      %p273 = por %p271, %p272
      %p274 = scmp.ne.s32.totalorder %s266, %s269
      %p275 = scmp.eq.s32.totalorder %s20, 0
      %p276 = por %p274, %p275
      %p277 = scmp.ne.s32.totalorder %s266, %s269
      %p278 = scmp.eq.s32.totalorder %s25, 1
      %p279 = por %p277, %p278
      %p280 = scmp.ne.s32.totalorder %s269, %s270
      %p281 = scmp.eq.s32.totalorder %s25, 0
      %p282 = por %p280, %p281
      %p283 = scmp.ne.s32.totalorder %s269, %s270
      %p284 = scmp.eq.s32.totalorder %s26, 1
      %p285 = por %p283, %p284
      %p287 = scmp.ne.s32.totalorder %s270, %s286
      %p288 = scmp.eq.s32.totalorder %s26, 0
      %p289 = por %p287, %p288
      %p290 = scmp.le.s32.totalorder 1, %s20
      %p291 = scmp.lt.s32.totalorder %s20, 3
      %p292 = pnand %p290, %p291
      %p293 = pneg %p292
      // Predicated region
      $region9: #{tpu_custom_call.1} parent=5 // pred_check
        _
      $region10: #{tpu_custom_call.1} parent=5 // pred_check_branch
        %295 = sbr.rel (%p292) target = $region12
      $region11: #{tpu_custom_call.1} parent=5 // pred_region
        %s296 = ssub.s32 %s20, 1
        // Predicated region
        $region13: #{tpu_custom_call.1} parent=11 // pred_check
          %p297 = pneg %p67
        $region14: #{tpu_custom_call.1} parent=11 // pred_check_branch
          %299 = sbr.rel (%p297) target = $region16
        $region15: #{tpu_custom_call.1} parent=11 // pred_region
          _
        $region16: #{tpu_custom_call.1} parent=11 // pred_fallthru
          _
        // Predicated region
        $region17: #{tpu_custom_call.1} parent=11 // pred_check
          %p300 = pneg %p88
        $region18: #{tpu_custom_call.1} parent=11 // pred_check_branch
          %302 = sbr.rel (%p300) target = $region20
        $region19: #{tpu_custom_call.1} parent=11 // pred_region
          _
        $region20: #{tpu_custom_call.1} parent=11 // pred_fallthru
          _
        // Predicated region
        $region21: #{tpu_custom_call.1} parent=11 // pred_check
          %p303 = pneg %p109
        $region22: #{tpu_custom_call.1} parent=11 // pred_check_branch
          %305 = sbr.rel (%p303) target = $region24
        $region23: #{tpu_custom_call.1} parent=11 // pred_region
          _
        $region24: #{tpu_custom_call.1} parent=11 // pred_fallthru
          _
        // Predicated region
        $region25: #{tpu_custom_call.1} parent=11 // pred_check
          %p306 = pneg %p130
        $region26: #{tpu_custom_call.1} parent=11 // pred_check_branch
          %308 = sbr.rel (%p306) target = $region28
        $region27: #{tpu_custom_call.1} parent=11 // pred_region
          _
        $region28: #{tpu_custom_call.1} parent=11 // pred_fallthru
          _
        // Predicated region
        $region29: #{tpu_custom_call.1} parent=11 // pred_check
          %p309 = pneg %p151
        $region30: #{tpu_custom_call.1} parent=11 // pred_check_branch
          %311 = sbr.rel (%p309) target = $region32
        $region31: #{tpu_custom_call.1} parent=11 // pred_region
          _
        $region32: #{tpu_custom_call.1} parent=11 // pred_fallthru
          _
        // Predicated region
        $region33: #{tpu_custom_call.1} parent=11 // pred_check
          %p312 = pneg %p172
        $region34: #{tpu_custom_call.1} parent=11 // pred_check_branch
          %314 = sbr.rel (%p312) target = $region36
        $region35: #{tpu_custom_call.1} parent=11 // pred_region
          _
        $region36: #{tpu_custom_call.1} parent=11 // pred_fallthru
          _
        // Predicated region
        $region37: #{tpu_custom_call.1} parent=11 // pred_check
          %p315 = pneg %p193
        $region38: #{tpu_custom_call.1} parent=11 // pred_check_branch
          %317 = sbr.rel (%p315) target = $region40
        $region39: #{tpu_custom_call.1} parent=11 // pred_region
          _
        $region40: #{tpu_custom_call.1} parent=11 // pred_fallthru
          _
        // Predicated region
        $region41: #{tpu_custom_call.1} parent=11 // pred_check
          %p318 = pneg %p214
        $region42: #{tpu_custom_call.1} parent=11 // pred_check_branch
          %320 = sbr.rel (%p318) target = $region44
        $region43: #{tpu_custom_call.1} parent=11 // pred_region
          _
        $region44: #{tpu_custom_call.1} parent=11 // pred_fallthru
          _
        // Predicated region
        $region45: #{tpu_custom_call.1} parent=11 // pred_check
          %p321 = pneg %p235
        $region46: #{tpu_custom_call.1} parent=11 // pred_check_branch
          %323 = sbr.rel (%p321) target = $region48
        $region47: #{tpu_custom_call.1} parent=11 // pred_region
          _
        $region48: #{tpu_custom_call.1} parent=11 // pred_fallthru
          _
        // Predicated region
        $region49: #{tpu_custom_call.1} parent=11 // pred_check
          %p324 = pneg %p256
        $region50: #{tpu_custom_call.1} parent=11 // pred_check_branch
          %326 = sbr.rel (%p324) target = $region52
        $region51: #{tpu_custom_call.1} parent=11 // pred_region
          _
        $region52: #{tpu_custom_call.1} parent=11 // pred_fallthru
          _
      $region12: #{tpu_custom_call.1} parent=5 // pred_fallthru
        _
      %p327 = scmp.lt.s32.totalorder %s20, 2
      // Predicated region
      $region53: #{tpu_custom_call.1} parent=5 // pred_check
        %p328 = pneg %p327
      $region54: #{tpu_custom_call.1} parent=5 // pred_check_branch
        %330 = sbr.rel (%p328) target = $region56
      $region55: #{tpu_custom_call.1} parent=5 // pred_region
        // Predicated region
        $region57: #{tpu_custom_call.1} parent=55 // pred_check
          %p331 = pneg %p40
        $region58: #{tpu_custom_call.1} parent=55 // pred_check_branch
          %333 = sbr.rel (%p331) target = $region60
        $region59: #{tpu_custom_call.1} parent=55 // pred_region
          %p334 = scmp.lt.s32.totalorder %s20, 1
          %s335 = scalar_select %p334, %s20, 1
          %s336 = smul.addr %s335, 2
          %s337 = smul.addr %s336, 8
          %s338 = scalar_lea.vmem %s0, %s337
        $region60: #{tpu_custom_call.1} parent=55 // pred_fallthru
          _
      $region56: #{tpu_custom_call.1} parent=5 // pred_fallthru
        _
      %p339 = scmp.le.s32.totalorder 1, %s20
      %p340 = scmp.lt.s32.totalorder %s20, 3
      %p341 = pnand %p339, %p340
      %p342 = pneg %p341
      // Predicated region
      $region61: #{tpu_custom_call.1} parent=5 // pred_check
        _
      $region62: #{tpu_custom_call.1} parent=5 // pred_check_branch
        %344 = sbr.rel (%p341) target = $region64
      $region63: #{tpu_custom_call.1} parent=5 // pred_region
        %s345 = ssub.s32 %s20, 1
        %p346 = scmp.lt.s32.totalorder %s25, 1
        %s347 = scalar_select %p346, %s25, 1
        %s348 = smul.addr %s347, 2
        %s349 = smul.addr %s348, 8
        %s350 = scalar_lea.vmem %s0, %s349
        %p351 = pneg %p46
        %p352 = pneg %p43
        %p353 = pneg %p67
        %p354 = pneg %p64
        %p355 = pneg %p88
        %p356 = pneg %p85
        %p357 = pneg %p109
        %p358 = pneg %p106
        %p359 = pneg %p130
        %p360 = pneg %p127
        %p361 = pneg %p151
        %p362 = pneg %p148
        %p363 = pneg %p172
        %p364 = pneg %p169
        %p365 = pneg %p193
        %p366 = pneg %p190
        %p367 = pneg %p214
        %p368 = pneg %p211
        %p369 = pneg %p235
        %p370 = pneg %p232
        %p371 = pneg %p256
        %p372 = pneg %p253
        %p373 = pneg %p282
        %p374 = pneg %p279
        %s375 = sand.u32 %s269, 1
        %s376 = scalar_lea.sflag [#allocation3], %s375
        %s377 = sand.u32 %s269, 1
        %s378 = smul.addr %s377, 16
        %s379 = scalar_lea.vmem [#allocation2], %s378
        %p380 = scmp.lt.s32.totalorder %s25, 1
        %s381 = scalar_select %p380, %s25, 1
        %s382 = smul.addr %s381, 2
        %s383 = smul.addr %s382, 8
        %s384 = scalar_lea.vmem %s0, %s383
        %v386 = vld [vmem:[%s384] sm:$0xff]
        %v387 = vld [vmem:[%s384 + $0x8] sm:$0xff]
        %vm388 = vcmask 261120
        %v389 = vsel %vm388, %v386, 0.0
        %390 = vadd.xlane.f32.xlu0 %v389
        %v391 = vpop.xlane.xlu0 %390
        %v392 = vsel %vm388, %v387, 0.0
        %393 = vadd.xlane.f32.xlu0 %v392
        %v394 = vpop.xlane.xlu0 %393
        %v395 = vrcp.pop 32.0
        %v396 = vmul.f32 32.0, %v395
        %v397 = vsub.f32 1.0, %v396
        %v398 = vmul.f32 %v395, %v397
        %v399 = vadd.f32 %v395, %v398
        %vm400 = vweird.f32 %v395
        %v401 = vsel %vm400, %v395, %v399
        %v402 = vmul.f32 %v391, %v401
        %v403 = vmul.f32 %v394, %v401
        %v404 = vsub.f32 %v386, %v402
        %v405 = vsub.f32 %v387, %v403
        %v406 = vmul.f32 %v404, %v404
        %v407 = vmul.f32 %v405, %v405
        %v408 = vsel %vm388, %v406, 0.0
        %409 = vadd.xlane.f32.xlu0 %v408
        %v410 = vpop.xlane.xlu0 %409
        %v411 = vsel %vm388, %v407, 0.0
        %412 = vadd.xlane.f32.xlu0 %v411
        %v413 = vpop.xlane.xlu0 %412
        %v414 = vmul.f32 %v410, %v401
        %v415 = vmul.f32 %v413, %v401
        %v416 = vadd.f32 %v414, 1e-06
        %v417 = vadd.f32 %v415, 1e-06
        %v418 = vrsqrt.pop %v416
        %v419 = vmul.f32 %v418, %v416
        %v420 = vmul.f32 %v419, %v418
        %v421 = vmul.f32 0.5, %v420
        %v422 = vsub.f32 1.5, %v421
        %v423 = vmul.f32 %v418, %v422
        %vm424 = vweird.f32 %v416
        %vm425 = vweird.f32 %v418
        %vm426 = vmor %vm424, %vm425
        %v427 = vsel %vm426, %v418, %v423
        %v428 = vrsqrt.pop %v417
        %v429 = vmul.f32 %v428, %v417
        %v430 = vmul.f32 %v429, %v428
        %v431 = vmul.f32 0.5, %v430
        %v432 = vsub.f32 1.5, %v431
        %v433 = vmul.f32 %v428, %v432
        %vm434 = vweird.f32 %v417
        %vm435 = vweird.f32 %v428
        %vm436 = vmor %vm434, %vm435
        %v437 = vsel %vm436, %v428, %v433
        %v438 = vmul.f32 %v404, %v427
        %v439 = vmul.f32 %v405, %v437
        %v440 = vld [vmem:[%s7] sm:$0x1]
        %v442 = vperm.slane %v440, 0
        %v444 = vmul.f32 %v438, %v442
        %v445 = vmul.f32 %v439, %v442
        %v446 = vld [vmem:[%s8] sm:$0x1]
        %v448 = vperm.slane %v446, 0
        %v450 = vadd.f32 %v444, %v448
        %v451 = vadd.f32 %v445, %v448
        %v452 = vpack.c.bf16 %v451, %v450
        %v453 = vld [vmem:[%s2] sm:$0xf]
        %v454 = vld [vmem:[%s2 + $0x4] sm:$0xf]
        %v455 = vld [vmem:[%s2 + $0x8] sm:$0xf]
        %v456 = vld [vmem:[%s2 + $0xc] sm:$0xf]
        %v461 = vunpack.c.l.b16 %v453
        %v462 = vunpack.c.l.b16 %v454
        %v463 = vunpack.c.l.b16 %v455
        %v464 = vunpack.c.l.b16 %v456
        %v465 = vpack.c.b16 %v462, %v461
        %v466 = vpack.c.b16 %v464, %v463
        %v470 = vsel %vm388, %v452, 0
        %472 = vmatpush.bf16.msra.mxu0 0
        %473 = vmatpush.bf16.msra.mxu0 0
        %474 = vmatpush.bf16.msra.mxu0 0
        %475 = vmatpush.bf16.msra.mxu0 0
        %476 = vmatpush.bf16.msra.mxu0 0
        %477 = vmatpush.bf16.msra.mxu0 0
        %478 = vmatpush.bf16.msra.mxu0 %v466
        %479 = vmatpush.bf16.msra.mxu0 %v465
        %480 = vmatmul.bf16.gmra.mxu0 %v470
        %v481 = vpop.f32.mrf.mxu0
        %v482 = vadd.f32 0.0, %v481
        %v483 = vpop.f32.mrf.mxu0
        %v484 = vadd.f32 0.0, %v483
        %485 = vdwg.mxu0
        %v486 = vld [vmem:[%s3] sm:$0xff]
        %v487 = vld [vmem:[%s3 + $0x8] sm:$0xff]
        %v488 = vadd.f32 %v482, %v486
        %v489 = vadd.f32 %v484, %v487
        %v490 = vpack.c.bf16 %v489, %v488
        %v491 = vld [vmem:[%s4] sm:$0x1]
        %v493 = vperm.slane %v491, 0
        %494 = vrot.lane.b32.xlu0 %v493, 8
        %v495 = vpop.permute.xlu0 %494
        %v497 = vadd.f32 %v482, %v495
        %v498 = vadd.f32 %v484, %v495
        %v499 = vpack.c.bf16 %v498, %v497
        %v500 = vld [vmem:[%s1] sm:$0xf]
        %v501 = vld [vmem:[%s1 + $0x4] sm:$0xf]
        %v504 = vunpack.c.l.b16 %v500
        %v505 = vunpack.c.l.b16 %v501
        %v506 = vpack.c.b16 %v505, %v504
        %vm507 = vcmask 64512
        %v509 = vsel %vm507, %v506, 0
        %v512 = vsel %vm507, %v490, 0
        %514 = vmatpush.bf16.xpose.msra.mxu0 0
        %515 = vmatpush.bf16.xpose.msra.mxu0 0
        %516 = vmatpush.bf16.xpose.msra.mxu0 0
        %517 = vmatpush.bf16.xpose.msra.mxu0 0
        %518 = vmatpush.bf16.xpose.msra.mxu0 0
        %519 = vmatpush.bf16.xpose.msra.mxu0 0
        %520 = vmatpush.bf16.xpose.msra.mxu0 0
        %521 = vmatpush.bf16.xpose.msra.mxu0 %v512
        %522 = vmatmul.bf16.gmra.mxu0 %v509
        %v523 = vpop.f32.mrf.mxu0
        %v524 = vadd.f32 0.0, %v523
        %v525 = vpop.f32.mrf.mxu0
        %v526 = vadd.f32 0.0, %v525
        %527 = vdwg.mxu0
        %vm528 = vcmask 130048
        %v529 = vsel %vm528, %v524, -inf
        %530 = vmax.xlane.f32.xlu0 %v529
        %v531 = vpop.xlane.xlu0 %530
        %v532 = vsel %vm528, %v526, -inf
        %533 = vmax.xlane.f32.xlu0 %v532
        %v534 = vpop.xlane.xlu0 %533
        %v535 = vsub.f32 %v524, %v531
        %v536 = vsub.f32 %v526, %v534
        %v537 = vmul.f32 %v535, 1.442695
        %v538 = vpow.pop %v537
        %v539 = vmul.f32 %v536, 1.442695
        %v540 = vpow.pop %v539
        %v541 = vsel %vm528, %v538, 0.0
        %542 = vadd.xlane.f32.xlu0 %v541
        %v543 = vpop.xlane.xlu0 %542
        %v544 = vsel %vm528, %v540, 0.0
        %545 = vadd.xlane.f32.xlu0 %v544
        %v546 = vpop.xlane.xlu0 %545
        %v547 = vrcp.pop %v543
        %v548 = vrcp.pop %v546
        %v549 = vmul.f32 %v538, %v547
        %v550 = vmul.f32 %v540, %v548
        %v551 = vpack.c.bf16 %v550, %v549
        %553 = vrot.lane.b32.xlu0 %v499, 120
        %v554 = vpop.permute.xlu0 %553
        %v557 = vsel %vm528, %v551, 0
        %559 = vmatpush.bf16.msra.mxu0 0
        %560 = vmatpush.bf16.msra.mxu0 0
        %561 = vmatpush.bf16.msra.mxu0 0
        %562 = vmatpush.bf16.msra.mxu0 0
        %563 = vmatpush.bf16.msra.mxu0 0
        %564 = vmatpush.bf16.msra.mxu0 0
        %565 = vmatpush.bf16.msra.mxu0 0
        %566 = vmatpush.bf16.msra.mxu0 %v554
        %567 = vmatmul.bf16.gmra.mxu0 %v557
        %v568 = vpop.f32.mrf.mxu0
        %v569 = vadd.f32 0.0, %v568
        %v570 = vpop.f32.mrf.mxu0
        %v571 = vadd.f32 0.0, %v570
        %572 = vdwg.mxu0
        %v573 = vpack.c.bf16 %v571, %v569
        %v574 = vld [vmem:[%s5] sm:$0xf]
        %s575 = scalar_lea.vmem %s2, 16
        %v576 = vld [vmem:[%s575] sm:$0xf]
        %v577 = vld [vmem:[%s575 + $0x4] sm:$0xf]
        %v578 = vld [vmem:[%s575 + $0x8] sm:$0xf]
        %v579 = vld [vmem:[%s575 + $0xc] sm:$0xf]
        %v584 = vunpack.c.l.b16 %v576
        %v585 = vunpack.c.l.b16 %v577
        %v586 = vunpack.c.l.b16 %v578
        %v587 = vunpack.c.l.b16 %v579
        %v588 = vpack.c.b16 %v585, %v584
        %v589 = vpack.c.b16 %v587, %v586
        %592 = vmatpush.bf16.msra.mxu0 0
        %593 = vmatpush.bf16.msra.mxu0 0
        %594 = vmatpush.bf16.msra.mxu0 0
        %595 = vmatpush.bf16.msra.mxu0 0
        %596 = vmatpush.bf16.msra.mxu0 0
        %597 = vmatpush.bf16.msra.mxu0 0
        %598 = vmatpush.bf16.msra.mxu0 %v589
        %599 = vmatpush.bf16.msra.mxu0 %v588
        %600 = vmatmul.bf16.gmra.mxu0 %v470
        %v601 = vpop.f32.mrf.mxu0
        %v602 = vadd.f32 0.0, %v601
        %v603 = vpop.f32.mrf.mxu0
        %v604 = vadd.f32 0.0, %v603
        %605 = vdwg.mxu0
        %s606 = scalar_lea.vmem %s3, 16
        %v607 = vld [vmem:[%s606] sm:$0xff]
        %v608 = vld [vmem:[%s606 + $0x8] sm:$0xff]
        %v609 = vadd.f32 %v602, %v607
        %v610 = vadd.f32 %v604, %v608
        %v611 = vpack.c.bf16 %v610, %v609
        %s612 = scalar_lea.vmem %s4, 1
        %v613 = vld [vmem:[%s612] sm:$0x1]
        %v615 = vperm.slane %v613, 0
        %616 = vrot.lane.b32.xlu0 %v615, 8
        %v617 = vpop.permute.xlu0 %616
        %v619 = vadd.f32 %v602, %v617
        %v620 = vadd.f32 %v604, %v617
        %v621 = vpack.c.bf16 %v620, %v619
        %s622 = scalar_lea.vmem %s1, 8
        %v623 = vld [vmem:[%s622] sm:$0xf]
        %v624 = vld [vmem:[%s622 + $0x4] sm:$0xf]
        %v627 = vunpack.c.l.b16 %v623
        %v628 = vunpack.c.l.b16 %v624
        %v629 = vpack.c.b16 %v628, %v627
        %v631 = vsel %vm507, %v629, 0
        %v634 = vsel %vm507, %v611, 0
        %636 = vmatpush.bf16.xpose.msra.mxu0 0
        %637 = vmatpush.bf16.xpose.msra.mxu0 0
        %638 = vmatpush.bf16.xpose.msra.mxu0 0
        %639 = vmatpush.bf16.xpose.msra.mxu0 0
        %640 = vmatpush.bf16.xpose.msra.mxu0 0
        %641 = vmatpush.bf16.xpose.msra.mxu0 0
        %642 = vmatpush.bf16.xpose.msra.mxu0 0
        %643 = vmatpush.bf16.xpose.msra.mxu0 %v634
        %644 = vmatmul.bf16.gmra.mxu0 %v631
        %v645 = vpop.f32.mrf.mxu0
        %v646 = vadd.f32 0.0, %v645
        %v647 = vpop.f32.mrf.mxu0
        %v648 = vadd.f32 0.0, %v647
        %649 = vdwg.mxu0
        %v650 = vsel %vm528, %v646, -inf
        %651 = vmax.xlane.f32.xlu0 %v650
        %v652 = vpop.xlane.xlu0 %651
        %v653 = vsel %vm528, %v648, -inf
        %654 = vmax.xlane.f32.xlu0 %v653
        %v655 = vpop.xlane.xlu0 %654
        %v656 = vsub.f32 %v646, %v652
        %v657 = vsub.f32 %v648, %v655
        %v658 = vmul.f32 %v656, 1.442695
        %v659 = vpow.pop %v658
        %v660 = vmul.f32 %v657, 1.442695
        %v661 = vpow.pop %v660
        %v662 = vsel %vm528, %v659, 0.0
        %663 = vadd.xlane.f32.xlu0 %v662
        %v664 = vpop.xlane.xlu0 %663
        %v665 = vsel %vm528, %v661, 0.0
        %666 = vadd.xlane.f32.xlu0 %v665
        %v667 = vpop.xlane.xlu0 %666
        %v668 = vrcp.pop %v664
        %v669 = vrcp.pop %v667
        %v670 = vmul.f32 %v659, %v668
        %v671 = vmul.f32 %v661, %v669
        %v672 = vpack.c.bf16 %v671, %v670
        %674 = vrot.lane.b32.xlu0 %v621, 120
        %v675 = vpop.permute.xlu0 %674
        %v678 = vsel %vm528, %v672, 0
        %680 = vmatpush.bf16.msra.mxu0 0
        %681 = vmatpush.bf16.msra.mxu0 0
        %682 = vmatpush.bf16.msra.mxu0 0
        %683 = vmatpush.bf16.msra.mxu0 0
        %684 = vmatpush.bf16.msra.mxu0 0
        %685 = vmatpush.bf16.msra.mxu0 0
        %686 = vmatpush.bf16.msra.mxu0 0
        %687 = vmatpush.bf16.msra.mxu0 %v675
        %688 = vmatmul.bf16.gmra.mxu0 %v678
        %v689 = vpop.f32.mrf.mxu0
        %v690 = vadd.f32 0.0, %v689
        %v691 = vpop.f32.mrf.mxu0
        %v692 = vadd.f32 0.0, %v691
        %693 = vdwg.mxu0
        %v694 = vpack.c.bf16 %v692, %v690
        %s695 = scalar_lea.vmem %s5, 4
        %v696 = vld [vmem:[%s695] sm:$0xf]
        %v698 = vsel %vm507, %v694, 0
        %vm700 = vcmask 1043456
        %v702 = vsel %vm700, %v696, 0
        %704 = vmatpush.bf16.msra.mxu0 0
        %705 = vmatpush.bf16.msra.mxu0 0
        %706 = vmatpush.bf16.msra.mxu0 0
        %707 = vmatpush.bf16.msra.mxu0 0
        %708 = vmatpush.bf16.msra.mxu0 0
        %709 = vmatpush.bf16.msra.mxu0 0
        %710 = vmatpush.bf16.msra.mxu0 0
        %711 = vmatpush.bf16.msra.mxu0 %v702
        %712 = vmatmul.bf16.gmra.mxu0 %v698
        %v713 = vpop.f32.mrf.mxu0
        %v714 = vadd.f32 0.0, %v713
        %v715 = vpop.f32.mrf.mxu0
        %v716 = vadd.f32 0.0, %v715
        %717 = vdwg.mxu0
        %v719 = vsel %vm507, %v573, 0
        %v722 = vsel %vm700, %v574, 0
        %724 = vmatpush.bf16.msra.mxu0 0
        %725 = vmatpush.bf16.msra.mxu0 0
        %726 = vmatpush.bf16.msra.mxu0 0
        %727 = vmatpush.bf16.msra.mxu0 0
        %728 = vmatpush.bf16.msra.mxu0 0
        %729 = vmatpush.bf16.msra.mxu0 0
        %730 = vmatpush.bf16.msra.mxu0 0
        %731 = vmatpush.bf16.msra.mxu0 %v722
        %732 = vmatmul.bf16.gmra.mxu0 %v719
        %v733 = vpop.f32.mrf.mxu0
        %v734 = vadd.f32 %v714, %v733
        %v735 = vpop.f32.mrf.mxu0
        %v736 = vadd.f32 %v716, %v735
        %737 = vdwg.mxu0
        %s738 = scalar_lea.vmem %s2, 32
        %v739 = vld [vmem:[%s738] sm:$0xf]
        %v740 = vld [vmem:[%s738 + $0x4] sm:$0xf]
        %v741 = vld [vmem:[%s738 + $0x8] sm:$0xf]
        %v742 = vld [vmem:[%s738 + $0xc] sm:$0xf]
        %v747 = vunpack.c.l.b16 %v739
        %v748 = vunpack.c.l.b16 %v740
        %v749 = vunpack.c.l.b16 %v741
        %v750 = vunpack.c.l.b16 %v742
        %v751 = vpack.c.b16 %v748, %v747
        %v752 = vpack.c.b16 %v750, %v749
        %755 = vmatpush.bf16.msra.mxu0 0
        %756 = vmatpush.bf16.msra.mxu0 0
        %757 = vmatpush.bf16.msra.mxu0 0
        %758 = vmatpush.bf16.msra.mxu0 0
        %759 = vmatpush.bf16.msra.mxu0 0
        %760 = vmatpush.bf16.msra.mxu0 0
        %761 = vmatpush.bf16.msra.mxu0 %v752
        %762 = vmatpush.bf16.msra.mxu0 %v751
        %763 = vmatmul.bf16.gmra.mxu0 %v470
        %v764 = vpop.f32.mrf.mxu0
        %v765 = vadd.f32 0.0, %v764
        %v766 = vpop.f32.mrf.mxu0
        %v767 = vadd.f32 0.0, %v766
        %768 = vdwg.mxu0
        %s769 = scalar_lea.vmem %s3, 32
        %v770 = vld [vmem:[%s769] sm:$0xff]
        %v771 = vld [vmem:[%s769 + $0x8] sm:$0xff]
        %v772 = vadd.f32 %v765, %v770
        %v773 = vadd.f32 %v767, %v771
        %v774 = vpack.c.bf16 %v773, %v772
        %s775 = scalar_lea.vmem %s4, 2
        %v776 = vld [vmem:[%s775] sm:$0x1]
        %v778 = vperm.slane %v776, 0
        %779 = vrot.lane.b32.xlu0 %v778, 8
        %v780 = vpop.permute.xlu0 %779
        %v782 = vadd.f32 %v765, %v780
        %v783 = vadd.f32 %v767, %v780
        %v784 = vpack.c.bf16 %v783, %v782
        %s785 = scalar_lea.vmem %s1, 16
        %v786 = vld [vmem:[%s785] sm:$0xf]
        %v787 = vld [vmem:[%s785 + $0x4] sm:$0xf]
        %v790 = vunpack.c.l.b16 %v786
        %v791 = vunpack.c.l.b16 %v787
        %v792 = vpack.c.b16 %v791, %v790
        %v794 = vsel %vm507, %v792, 0
        %v797 = vsel %vm507, %v774, 0
        %799 = vmatpush.bf16.xpose.msra.mxu0 0
        %800 = vmatpush.bf16.xpose.msra.mxu0 0
        %801 = vmatpush.bf16.xpose.msra.mxu0 0
        %802 = vmatpush.bf16.xpose.msra.mxu0 0
        %803 = vmatpush.bf16.xpose.msra.mxu0 0
        %804 = vmatpush.bf16.xpose.msra.mxu0 0
        %805 = vmatpush.bf16.xpose.msra.mxu0 0
        %806 = vmatpush.bf16.xpose.msra.mxu0 %v797
        %807 = vmatmul.bf16.gmra.mxu0 %v794
        %v808 = vpop.f32.mrf.mxu0
        %v809 = vadd.f32 0.0, %v808
        %v810 = vpop.f32.mrf.mxu0
        %v811 = vadd.f32 0.0, %v810
        %812 = vdwg.mxu0
        %v813 = vsel %vm528, %v809, -inf
        %814 = vmax.xlane.f32.xlu0 %v813
        %v815 = vpop.xlane.xlu0 %814
        %v816 = vsel %vm528, %v811, -inf
        %817 = vmax.xlane.f32.xlu0 %v816
        %v818 = vpop.xlane.xlu0 %817
        %v819 = vsub.f32 %v809, %v815
        %v820 = vsub.f32 %v811, %v818
        %v821 = vmul.f32 %v819, 1.442695
        %v822 = vpow.pop %v821
        %v823 = vmul.f32 %v820, 1.442695
        %v824 = vpow.pop %v823
        %v825 = vsel %vm528, %v822, 0.0
        %826 = vadd.xlane.f32.xlu0 %v825
        %v827 = vpop.xlane.xlu0 %826
        %v828 = vsel %vm528, %v824, 0.0
        %829 = vadd.xlane.f32.xlu0 %v828
        %v830 = vpop.xlane.xlu0 %829
        %v831 = vrcp.pop %v827
        %v832 = vrcp.pop %v830
        %v833 = vmul.f32 %v822, %v831
        %v834 = vmul.f32 %v824, %v832
        %v835 = vpack.c.bf16 %v834, %v833
        %837 = vrot.lane.b32.xlu0 %v784, 120
        %v838 = vpop.permute.xlu0 %837
        %v841 = vsel %vm528, %v835, 0
        %843 = vmatpush.bf16.msra.mxu0 0
        %844 = vmatpush.bf16.msra.mxu0 0
        %845 = vmatpush.bf16.msra.mxu0 0
        %846 = vmatpush.bf16.msra.mxu0 0
        %847 = vmatpush.bf16.msra.mxu0 0
        %848 = vmatpush.bf16.msra.mxu0 0
        %849 = vmatpush.bf16.msra.mxu0 0
        %850 = vmatpush.bf16.msra.mxu0 %v838
        %851 = vmatmul.bf16.gmra.mxu0 %v841
        %v852 = vpop.f32.mrf.mxu0
        %v853 = vadd.f32 0.0, %v852
        %v854 = vpop.f32.mrf.mxu0
        %v855 = vadd.f32 0.0, %v854
        %856 = vdwg.mxu0
        %v857 = vpack.c.bf16 %v855, %v853
        %s858 = scalar_lea.vmem %s5, 8
        %v859 = vld [vmem:[%s858] sm:$0xf]
        %v861 = vsel %vm507, %v857, 0
        %v864 = vsel %vm700, %v859, 0
        %866 = vmatpush.bf16.msra.mxu0 0
        %867 = vmatpush.bf16.msra.mxu0 0
        %868 = vmatpush.bf16.msra.mxu0 0
        %869 = vmatpush.bf16.msra.mxu0 0
        %870 = vmatpush.bf16.msra.mxu0 0
        %871 = vmatpush.bf16.msra.mxu0 0
        %872 = vmatpush.bf16.msra.mxu0 0
        %873 = vmatpush.bf16.msra.mxu0 %v864
        %874 = vmatmul.bf16.gmra.mxu0 %v861
        %v875 = vpop.f32.mrf.mxu0
        %v876 = vadd.f32 0.0, %v875
        %v877 = vpop.f32.mrf.mxu0
        %v878 = vadd.f32 0.0, %v877
        %879 = vdwg.mxu0
        %v880 = vadd.f32 %v734, %v876
        %v881 = vadd.f32 %v736, %v878
        %s882 = scalar_lea.vmem %s2, 48
        %v883 = vld [vmem:[%s882] sm:$0xf]
        %v884 = vld [vmem:[%s882 + $0x4] sm:$0xf]
        %v885 = vld [vmem:[%s882 + $0x8] sm:$0xf]
        %v886 = vld [vmem:[%s882 + $0xc] sm:$0xf]
        %v891 = vunpack.c.l.b16 %v883
        %v892 = vunpack.c.l.b16 %v884
        %v893 = vunpack.c.l.b16 %v885
        %v894 = vunpack.c.l.b16 %v886
        %v895 = vpack.c.b16 %v892, %v891
        %v896 = vpack.c.b16 %v894, %v893
        %899 = vmatpush.bf16.msra.mxu0 0
        %900 = vmatpush.bf16.msra.mxu0 0
        %901 = vmatpush.bf16.msra.mxu0 0
        %902 = vmatpush.bf16.msra.mxu0 0
        %903 = vmatpush.bf16.msra.mxu0 0
        %904 = vmatpush.bf16.msra.mxu0 0
        %905 = vmatpush.bf16.msra.mxu0 %v896
        %906 = vmatpush.bf16.msra.mxu0 %v895
        %907 = vmatmul.bf16.gmra.mxu0 %v470
        %v908 = vpop.f32.mrf.mxu0
        %v909 = vadd.f32 0.0, %v908
        %v910 = vpop.f32.mrf.mxu0
        %v911 = vadd.f32 0.0, %v910
        %912 = vdwg.mxu0
        %s913 = scalar_lea.vmem %s3, 48
        %v914 = vld [vmem:[%s913] sm:$0xff]
        %v915 = vld [vmem:[%s913 + $0x8] sm:$0xff]
        %v916 = vadd.f32 %v909, %v914
        %v917 = vadd.f32 %v911, %v915
        %v918 = vpack.c.bf16 %v917, %v916
        %s919 = scalar_lea.vmem %s4, 3
        %v920 = vld [vmem:[%s919] sm:$0x1]
        %v922 = vperm.slane %v920, 0
        %923 = vrot.lane.b32.xlu0 %v922, 8
        %v924 = vpop.permute.xlu0 %923
        %v926 = vadd.f32 %v909, %v924
        %v927 = vadd.f32 %v911, %v924
        %v928 = vpack.c.bf16 %v927, %v926
        %s929 = scalar_lea.vmem %s1, 24
        %v930 = vld [vmem:[%s929] sm:$0xf]
        %v931 = vld [vmem:[%s929 + $0x4] sm:$0xf]
        %v934 = vunpack.c.l.b16 %v930
        %v935 = vunpack.c.l.b16 %v931
        %v936 = vpack.c.b16 %v935, %v934
        %v938 = vsel %vm507, %v936, 0
        %v941 = vsel %vm507, %v918, 0
        %943 = vmatpush.bf16.xpose.msra.mxu0 0
        %944 = vmatpush.bf16.xpose.msra.mxu0 0
        %945 = vmatpush.bf16.xpose.msra.mxu0 0
        %946 = vmatpush.bf16.xpose.msra.mxu0 0
        %947 = vmatpush.bf16.xpose.msra.mxu0 0
        %948 = vmatpush.bf16.xpose.msra.mxu0 0
        %949 = vmatpush.bf16.xpose.msra.mxu0 0
        %950 = vmatpush.bf16.xpose.msra.mxu0 %v941
        %951 = vmatmul.bf16.gmra.mxu0 %v938
        %v952 = vpop.f32.mrf.mxu0
        %v953 = vadd.f32 0.0, %v952
        %v954 = vpop.f32.mrf.mxu0
        %v955 = vadd.f32 0.0, %v954
        %956 = vdwg.mxu0
        %v957 = vsel %vm528, %v953, -inf
        %958 = vmax.xlane.f32.xlu0 %v957
        %v959 = vpop.xlane.xlu0 %958
        %v960 = vsel %vm528, %v955, -inf
        %961 = vmax.xlane.f32.xlu0 %v960
        %v962 = vpop.xlane.xlu0 %961
        %v963 = vsub.f32 %v953, %v959
        %v964 = vsub.f32 %v955, %v962
        %v965 = vmul.f32 %v963, 1.442695
        %v966 = vpow.pop %v965
        %v967 = vmul.f32 %v964, 1.442695
        %v968 = vpow.pop %v967
        %v969 = vsel %vm528, %v966, 0.0
        %970 = vadd.xlane.f32.xlu0 %v969
        %v971 = vpop.xlane.xlu0 %970
        %v972 = vsel %vm528, %v968, 0.0
        %973 = vadd.xlane.f32.xlu0 %v972
        %v974 = vpop.xlane.xlu0 %973
        %v975 = vrcp.pop %v971
        %v976 = vrcp.pop %v974
        %v977 = vmul.f32 %v966, %v975
        %v978 = vmul.f32 %v968, %v976
        %v979 = vpack.c.bf16 %v978, %v977
        %981 = vrot.lane.b32.xlu0 %v928, 120
        %v982 = vpop.permute.xlu0 %981
        %v985 = vsel %vm528, %v979, 0
        %987 = vmatpush.bf16.msra.mxu0 0
        %988 = vmatpush.bf16.msra.mxu0 0
        %989 = vmatpush.bf16.msra.mxu0 0
        %990 = vmatpush.bf16.msra.mxu0 0
        %991 = vmatpush.bf16.msra.mxu0 0
        %992 = vmatpush.bf16.msra.mxu0 0
        %993 = vmatpush.bf16.msra.mxu0 0
        %994 = vmatpush.bf16.msra.mxu0 %v982
        %995 = vmatmul.bf16.gmra.mxu0 %v985
        %v996 = vpop.f32.mrf.mxu0
        %v997 = vadd.f32 0.0, %v996
        %v998 = vpop.f32.mrf.mxu0
        %v999 = vadd.f32 0.0, %v998
        %1000 = vdwg.mxu0
        %v1001 = vpack.c.bf16 %v999, %v997
        %s1002 = scalar_lea.vmem %s5, 12
        %v1003 = vld [vmem:[%s1002] sm:$0xf]
        %v1005 = vsel %vm507, %v1001, 0
        %v1008 = vsel %vm700, %v1003, 0
        %1010 = vmatpush.bf16.msra.mxu0 0
        %1011 = vmatpush.bf16.msra.mxu0 0
        %1012 = vmatpush.bf16.msra.mxu0 0
        %1013 = vmatpush.bf16.msra.mxu0 0
        %1014 = vmatpush.bf16.msra.mxu0 0
        %1015 = vmatpush.bf16.msra.mxu0 0
        %1016 = vmatpush.bf16.msra.mxu0 0
        %1017 = vmatpush.bf16.msra.mxu0 %v1008
        %1018 = vmatmul.bf16.gmra.mxu0 %v1005
        %v1019 = vpop.f32.mrf.mxu0
        %v1020 = vadd.f32 0.0, %v1019
        %v1021 = vpop.f32.mrf.mxu0
        %v1022 = vadd.f32 0.0, %v1021
        %1023 = vdwg.mxu0
        %v1024 = vadd.f32 %v880, %v1020
        %v1025 = vadd.f32 %v881, %v1022
        %v1026 = vld [vmem:[%s6] sm:$0x1]
        %v1028 = vperm.slane %v1026, 0
        %v1030 = vadd.f32 %v1024, %v1028
        %v1031 = vadd.f32 %v1025, %v1028
        %v1032 = vsel %vm388, %v1030, 0.0
        %1033 = vadd.xlane.f32.xlu0 %v1032
        %v1034 = vpop.xlane.xlu0 %1033
        %v1035 = vsel %vm388, %v1031, 0.0
        %1036 = vadd.xlane.f32.xlu0 %v1035
        %v1037 = vpop.xlane.xlu0 %1036
        %v1038 = vmul.f32 %v1034, %v401
        %v1039 = vmul.f32 %v1037, %v401
        %v1040 = vsub.f32 %v1030, %v1038
        %v1041 = vsub.f32 %v1031, %v1039
        %v1042 = vmul.f32 %v1040, %v1040
        %v1043 = vmul.f32 %v1041, %v1041
        %v1044 = vsel %vm388, %v1042, 0.0
        %1045 = vadd.xlane.f32.xlu0 %v1044
        %v1046 = vpop.xlane.xlu0 %1045
        %v1047 = vsel %vm388, %v1043, 0.0
        %1048 = vadd.xlane.f32.xlu0 %v1047
        %v1049 = vpop.xlane.xlu0 %1048
        %v1050 = vmul.f32 %v1046, %v401
        %v1051 = vmul.f32 %v1049, %v401
        %v1052 = vadd.f32 %v1050, 1e-06
        %v1053 = vadd.f32 %v1051, 1e-06
        %v1054 = vrsqrt.pop %v1052
        %v1055 = vmul.f32 %v1054, %v1052
        %v1056 = vmul.f32 %v1055, %v1054
        %v1057 = vmul.f32 0.5, %v1056
        %v1058 = vsub.f32 1.5, %v1057
        %v1059 = vmul.f32 %v1054, %v1058
        %vm1060 = vweird.f32 %v1052
        %vm1061 = vweird.f32 %v1054
        %vm1062 = vmor %vm1060, %vm1061
        %v1063 = vsel %vm1062, %v1054, %v1059
        %v1064 = vrsqrt.pop %v1053
        %v1065 = vmul.f32 %v1064, %v1053
        %v1066 = vmul.f32 %v1065, %v1064
        %v1067 = vmul.f32 0.5, %v1066
        %v1068 = vsub.f32 1.5, %v1067
        %v1069 = vmul.f32 %v1064, %v1068
        %vm1070 = vweird.f32 %v1053
        %vm1071 = vweird.f32 %v1064
        %vm1072 = vmor %vm1070, %vm1071
        %v1073 = vsel %vm1072, %v1064, %v1069
        %v1074 = vmul.f32 %v1040, %v1063
        %v1075 = vmul.f32 %v1041, %v1073
        %v1076 = vld [vmem:[%s9] sm:$0x1]
        %v1078 = vperm.slane %v1076, 0
        %v1080 = vmul.f32 %v1074, %v1078
        %v1081 = vmul.f32 %v1075, %v1078
        %v1082 = vld [vmem:[%s10] sm:$0x1]
        %v1084 = vperm.slane %v1082, 0
        %v1086 = vadd.f32 %v1080, %v1084
        %v1087 = vadd.f32 %v1081, %v1084
        %1088 = vst.msk [vmem:[%s379] sm:$0xff] %vm388, %v1086
        %1089 = vst.msk [vmem:[%s379 + $0x8] sm:$0xff] %vm388, %v1087
        %s1090 = sand.u32 %s269, 1
        %s1091 = scalar_lea.sflag [#allocation3], %s1090
        %s1092 = sand.u32 %s269, 1
        %s1093 = smul.addr %s1092, 16
        %s1094 = scalar_lea.vmem [#allocation2], %s1093
        // Predicated region
        $region65: #{tpu_custom_call.1} parent=63 // pred_check
          %p1095 = pneg %p279
        $region66: #{tpu_custom_call.1} parent=63 // pred_check_branch
          %1097 = sbr.rel (%p1095) target = $region68
        $region67: #{tpu_custom_call.1} parent=63 // pred_region
          %1099 = vsyncadd %s1091, 0
          %s1100 = smul.addr %s25, 2
          %s1101 = smul.addr %s1100, 8
          %s1102 = scalar_lea.hbm %s11, %s1101
          %s1103 = sshll.u32 %s1094, 4
          %s1104 = int_to_ptr.vmem [resolvable:$true] %s1103
          %s1105 = sshll.u32 %s1102, 4
          %s1106 = int_to_ptr.hbm [resolvable:$true] %s1105
          %1111 = dma.vmem_to_hbm [thread:$0]  %s1104, 256, %s1106, %s1091, 128, 128, 8
        $region68: #{tpu_custom_call.1} parent=63 // pred_fallthru
          _
      $region64: #{tpu_custom_call.1} parent=5 // pred_fallthru
        _
      %p1112 = scmp.le.s32.totalorder 2, %s20
      // Predicated region
      $region69: #{tpu_custom_call.1} parent=5 // pred_check
        %p1113 = pneg %p1112
      $region70: #{tpu_custom_call.1} parent=5 // pred_check_branch
        %1115 = sbr.rel (%p1113) target = $region72
      $region71: #{tpu_custom_call.1} parent=5 // pred_region
        %s1116 = ssub.s32 %s20, 2
        // Predicated region
        $region73: #{tpu_custom_call.1} parent=71 // pred_check
          %p1117 = pneg %p285
        $region74: #{tpu_custom_call.1} parent=71 // pred_check_branch
          %1119 = sbr.rel (%p1117) target = $region76
        $region75: #{tpu_custom_call.1} parent=71 // pred_region
          %s1120 = sand.u32 %s270, 1
          %s1121 = scalar_lea.sflag [#allocation3], %s1120
          %s1122 = sand.u32 %s270, 1
          %s1123 = smul.addr %s1122, 16
          %s1124 = scalar_lea.vmem [#allocation2], %s1123
          %1126 = dma.done %s1121, 256
        $region76: #{tpu_custom_call.1} parent=71 // pred_fallthru
          _
      $region72: #{tpu_custom_call.1} parent=5 // pred_fallthru
        _
    $region6: #{tpu_custom_call.1} parent=1 // loop_footer
      %s24 = sadd.s32 1, %s20
    $region7: #{tpu_custom_call.1} parent=1 // loop_footer_branch
      %19 = sbr.rel target = $region3
    $region8: #{tpu_custom_call.1} parent=1 // loop_exit
      _
    %1127 = vsyncpa [#allocation3], 1
    %s1128 = scalar_lea.sflag [#allocation3], 1
    %1129 = vsyncpa %s1128, 1

</llo_original>
